<compile_context>
chip_gen: v5e
topology: v5e:2x2
jax: 0.10.0
libtpu: 0.0.40
codegen_flags: <defaults>
</compile_context>

<pallas_src>
import jax
import jax.numpy as jnp
from jax import lax
from jax.experimental import pallas as pl
from jax.experimental.pallas import tpu as pltpu

WINDOW_SIZE = 5
D_IN = 16 + 2 * WINDOW_SIZE      # 26
D_H = 128
LN_EPS = 1e-5
NEG_SLOPE = 0.01

# Row indices inside the packed (8, 128) "extras" block (2 rows are padding).
_B1, _B2, _B3, _B4, _GAMMA, _BETA = 0, 1, 2, 3, 4, 5


def _leaky_relu(h):
    # max(h, a*h) == LeakyReLU_a(h) for 0 < a < 1 (cheaper than where/select).
    return jnp.maximum(h, NEG_SLOPE * h)


def _round_up(v, m):
    return ((v + m - 1) // m) * m


def node_mlp_kernel(x_ref, w1_ref, w2_ref, w3_ref, w4_ref, ext_ref, o_ref):
    # Matmuls on the MXU with bf16 operands / f32 accumulation; elementwise
    # (bias, LeakyReLU, LayerNorm) kept in f32 on the VPU (portable to v5e).
    ext = ext_ref[...]                      # (8, 128) f32: b1..b4, gamma, beta
    b1 = ext[_B1:_B1 + 1, :]
    b2 = ext[_B2:_B2 + 1, :]
    b3 = ext[_B3:_B3 + 1, :]
    b4 = ext[_B4:_B4 + 1, :]
    gamma = ext[_GAMMA:_GAMMA + 1, :]
    beta = ext[_BETA:_BETA + 1, :]

    x = x_ref[...].astype(jnp.bfloat16)

    h = jnp.dot(x, w1_ref[...], preferred_element_type=jnp.float32) + b1
    h = _leaky_relu(h)
    h = jnp.dot(h.astype(jnp.bfloat16), w2_ref[...],
                preferred_element_type=jnp.float32) + b2
    h = _leaky_relu(h)
    h = jnp.dot(h.astype(jnp.bfloat16), w3_ref[...],
                preferred_element_type=jnp.float32) + b3
    h = _leaky_relu(h)
    h = jnp.dot(h.astype(jnp.bfloat16), w4_ref[...],
                preferred_element_type=jnp.float32) + b4

    # LayerNorm over the last (lane) dim, biased variance, elementwise affine.
    # Two INDEPENDENT reductions (E[h], E[h^2]) so the XLU work overlaps the
    # VPU work; var = E[h^2] - E[h]^2 in f32 (clamped for safety).
    # NOTE: on the final partial tile the padded rows hold undefined data; the
    # normalization is purely row-local and the padded rows are masked on
    # store, so this is benign.
    mean = jnp.mean(h, axis=-1, keepdims=True)
    mean_sq = jnp.mean(h * h, axis=-1, keepdims=True)
    var = jnp.maximum(mean_sq - mean * mean, 0.0)
    y = (h - mean) * lax.rsqrt(var + LN_EPS)
    o_ref[...] = (y * gamma + beta).astype(o_ref.dtype)


def pack_params(params):
    """f32 PyTorch-layout params -> kernel operands:
    bf16 weights (halves weight HBM traffic, native bf16 MXU) plus a single
    packed (8, 128) f32 block holding b1..b4, gamma, beta."""
    (w1, b1, w2, b2, w3, b3, w4, b4, gamma, beta) = params
    ext = jnp.zeros((8, D_H), jnp.float32)
    ext = ext.at[_B1].set(b1.reshape(D_H))
    ext = ext.at[_B2].set(b2.reshape(D_H))
    ext = ext.at[_B3].set(b3.reshape(D_H))
    ext = ext.at[_B4].set(b4.reshape(D_H))
    ext = ext.at[_GAMMA].set(gamma.reshape(D_H))
    ext = ext.at[_BETA].set(beta.reshape(D_H))
    return (w1.astype(jnp.bfloat16), w2.astype(jnp.bfloat16),
            w3.astype(jnp.bfloat16), w4.astype(jnp.bfloat16), ext)


def encode_node_mlp(x, packed, *, tile_m=2048):
    """x: [N, 26] float32. Returns [N, 128] float32. Handles ragged N."""
    N, d_in = x.shape
    assert d_in == D_IN
    w1, w2, w3, w4, ext = packed

    # Row tile selection:
    #  * large (amortizes ~0.35us per-grid-step pipeline overhead),
    #  * multiple of 128 (clean bf16 sublane packing / MXU M-passes),
    #  * EVEN number of near-equal grid steps so v7x's two TensorCores get
    #    balanced work along the "parallel" axis.
    # tile_m=2048 keeps the double-buffered x/out tiles + f32 intermediates
    # well under v5e's 16 MiB scoped-VMEM default.
    n_steps = max(2, pl.cdiv(N, tile_m))
    n_steps += n_steps % 2                       # force an even step count
    tm = min(_round_up(pl.cdiv(N, n_steps), 128), _round_up(tile_m, 128))
    grid = (pl.cdiv(N, tm),)

    def resident(shape):
        # Small tensors: whole tensor resident (constant index_map -> Pallas
        # does not re-fetch the block across grid steps).
        return pl.BlockSpec(shape, lambda i: (0, 0))

    flops = 2 * N * (D_IN * D_H + 3 * D_H * D_H)
    bytes_accessed = (x.size * x.dtype.itemsize          # input rows
                      + N * D_H * 4                      # f32 output rows
                      + sum(int(w.size) * w.dtype.itemsize
                            for w in (w1, w2, w3, w4))
                      + int(ext.size) * 4)

    return pl.pallas_call(
        node_mlp_kernel,
        out_shape=jax.ShapeDtypeStruct((N, D_H), jnp.float32),
        grid_spec=pltpu.PrefetchScalarGridSpec(
            num_scalar_prefetch=0,
            grid=grid,
            in_specs=[
                pl.BlockSpec((tm, D_IN), lambda i: (i, 0)),   # x row tile
                resident((D_IN, D_H)),                        # w1 (bf16)
                resident((D_H, D_H)),                         # w2 (bf16)
                resident((D_H, D_H)),                         # w3 (bf16)
                resident((D_H, D_H)),                         # w4 (bf16)
                resident((8, D_H)),                           # biases + LN params
            ],
            out_specs=pl.BlockSpec((tm, D_H), lambda i: (i, 0)),
        ),
        compiler_params=pltpu.CompilerParams(
            dimension_semantics=("parallel",)),
        cost_estimate=pl.CostEstimate(flops=flops,
                                      transcendentals=N,
                                      bytes_accessed=bytes_accessed),
    )(x, w1, w2, w3, w4, ext)


def init_params(key):
    """Deterministic synthetic params; shapes match the PyTorch module
    (weights kept as [in, out] so the kernel does x @ W + b)."""
    ks = jax.random.split(key, 8)

    def lin(kw, kb, fan_in, fan_out):
        bound = 1.0 / jnp.sqrt(fan_in)
        w = jax.random.uniform(kw, (fan_in, fan_out), jnp.float32, -bound, bound)
        b = jax.random.uniform(kb, (fan_out,), jnp.float32, -bound, bound)
        return w, b

    w1, b1 = lin(ks[0], ks[1], D_IN, D_H)
    w2, b2 = lin(ks[2], ks[3], D_H, D_H)
    w3, b3 = lin(ks[4], ks[5], D_H, D_H)
    w4, b4 = lin(ks[6], ks[7], D_H, D_H)
    gamma = jnp.ones((D_H,), jnp.float32)
    beta = jnp.zeros((D_H,), jnp.float32)
    return (w1, b1, w2, b2, w3, b3, w4, b4, gamma, beta)


def reference_forward(x, params):
    (w1, b1, w2, b2, w3, b3, w4, b4, gamma, beta) = params
    h = _leaky_relu(x @ w1 + b1)
    h = _leaky_relu(h @ w2 + b2)
    h = _leaky_relu(h @ w3 + b3)
    h = h @ w4 + b4
    mean = jnp.mean(h, axis=-1, keepdims=True)
    var = jnp.mean((h - mean) ** 2, axis=-1, keepdims=True)
    return (h - mean) * lax.rsqrt(var + LN_EPS) * gamma + beta


if __name__ == "__main__":
    key = jax.random.PRNGKey(0)
    k_x, k_p = jax.random.split(key)

    # Small, deliberately ragged node count (not a multiple of the tile) to
    # exercise the cdiv grid and the clipped final tile.
    N = 300
    x = jax.random.normal(k_x, (N, D_IN), jnp.float32)
    params = init_params(k_p)
    packed = pack_params(params)

    out = encode_node_mlp(x, packed)
    out = jax.block_until_ready(out)

    ref = reference_forward(x, params)
    assert out.shape == (N, D_H)
    # bf16 MXU operands with f32 accumulation -> loosen tolerance vs f32 ref.
    max_err = float(jnp.max(jnp.abs(out - ref)))
    assert jnp.allclose(out, ref, atol=5e-2, rtol=5e-2), f"max abs err {max_err}"

    print("KERNEL_OK")
</pallas_src>

<mosaic_0001>
module attributes {stable_mosaic.version = 11 : i64} {
  func.func @node_mlp_kernel(%arg0: i32, %arg1: memref<256x26xf32, #tpu.memory_space<vmem>>, %arg2: memref<26x128xbf16, #tpu.memory_space<vmem>>, %arg3: memref<128x128xbf16, #tpu.memory_space<vmem>>, %arg4: memref<128x128xbf16, #tpu.memory_space<vmem>>, %arg5: memref<128x128xbf16, #tpu.memory_space<vmem>>, %arg6: memref<8x128xf32, #tpu.memory_space<vmem>>, %arg7: memref<256x128xf32, #tpu.memory_space<vmem>>) attributes {dimension_semantics = [#tpu.dimension_semantics<parallel>], iteration_bounds = array<i64: 2>, scalar_prefetch = 0 : i64, scratch_operands = 0 : i64, tpu.core_type = #tpu.core_type<tc>, window_params = [{transform_indices = @transform_0, window_bounds = array<i64: 256, 26>}, {pipeline_mode = #tpu.pipeline_mode<synchronous>, transform_indices = @transform_1, window_bounds = array<i64: 26, 128>}, {pipeline_mode = #tpu.pipeline_mode<synchronous>, transform_indices = @transform_2, window_bounds = array<i64: 128, 128>}, {pipeline_mode = #tpu.pipeline_mode<synchronous>, transform_indices = @transform_3, window_bounds = array<i64: 128, 128>}, {pipeline_mode = #tpu.pipeline_mode<synchronous>, transform_indices = @transform_4, window_bounds = array<i64: 128, 128>}, {pipeline_mode = #tpu.pipeline_mode<synchronous>, transform_indices = @transform_5, window_bounds = array<i64: 8, 128>}, {transform_indices = @transform_6, window_bounds = array<i64: 256, 128>}]} {
    %c0 = arith.constant 0 : index
    %c0_0 = arith.constant 0 : index
    %0 = vector.load %arg6[%c0, %c0_0] : memref<8x128xf32, #tpu.memory_space<vmem>>, vector<8x128xf32>
    %1 = vector.extract_strided_slice %0 {offsets = [0, 0], sizes = [1, 128], strides = [1, 1]} : vector<8x128xf32> to vector<1x128xf32>
    %2 = vector.extract_strided_slice %0 {offsets = [1, 0], sizes = [1, 128], strides = [1, 1]} : vector<8x128xf32> to vector<1x128xf32>
    %3 = vector.extract_strided_slice %0 {offsets = [2, 0], sizes = [1, 128], strides = [1, 1]} : vector<8x128xf32> to vector<1x128xf32>
    %4 = vector.extract_strided_slice %0 {offsets = [3, 0], sizes = [1, 128], strides = [1, 1]} : vector<8x128xf32> to vector<1x128xf32>
    %5 = vector.extract_strided_slice %0 {offsets = [4, 0], sizes = [1, 128], strides = [1, 1]} : vector<8x128xf32> to vector<1x128xf32>
    %6 = vector.extract_strided_slice %0 {offsets = [5, 0], sizes = [1, 128], strides = [1, 1]} : vector<8x128xf32> to vector<1x128xf32>
    %c0_1 = arith.constant 0 : index
    %c0_2 = arith.constant 0 : index
    %7 = vector.load %arg1[%c0_1, %c0_2] : memref<256x26xf32, #tpu.memory_space<vmem>>, vector<256x26xf32>
    %8 = arith.truncf %7 : vector<256x26xf32> to vector<256x26xbf16>
    %c0_3 = arith.constant 0 : index
    %c0_4 = arith.constant 0 : index
    %9 = vector.load %arg2[%c0_3, %c0_4] : memref<26x128xbf16, #tpu.memory_space<vmem>>, vector<26x128xbf16>
    %cst = arith.constant dense<0.000000e+00> : vector<256x128xf32>
    %10 = tpu.matmul %8, %9, %cst {dimension_numbers = #tpu.dot_dimension_numbers<[1], [0], [0], [1], [0, 0, 1, 1], [], []>} : vector<256x26xbf16>, vector<26x128xbf16>, vector<256x128xf32> -> vector<256x128xf32>
    %11 = vector.broadcast %1 : vector<1x128xf32> to vector<256x128xf32>
    %12 = arith.addf %10, %11 : vector<256x128xf32>
    %cst_5 = arith.constant 0.00999999977 : f32
    %13 = vector.broadcast %cst_5 : f32 to vector<256x128xf32>
    %14 = arith.mulf %13, %12 : vector<256x128xf32>
    %15 = arith.maximumf %12, %14 : vector<256x128xf32>
    %16 = arith.truncf %15 : vector<256x128xf32> to vector<256x128xbf16>
    %c0_6 = arith.constant 0 : index
    %c0_7 = arith.constant 0 : index
    %17 = vector.load %arg3[%c0_6, %c0_7] : memref<128x128xbf16, #tpu.memory_space<vmem>>, vector<128x128xbf16>
    %cst_8 = arith.constant dense<0.000000e+00> : vector<256x128xf32>
    %18 = tpu.matmul %16, %17, %cst_8 {dimension_numbers = #tpu.dot_dimension_numbers<[1], [0], [0], [1], [0, 0, 1, 1], [], []>} : vector<256x128xbf16>, vector<128x128xbf16>, vector<256x128xf32> -> vector<256x128xf32>
    %19 = vector.broadcast %2 : vector<1x128xf32> to vector<256x128xf32>
    %20 = arith.addf %18, %19 : vector<256x128xf32>
    %cst_9 = arith.constant 0.00999999977 : f32
    %21 = vector.broadcast %cst_9 : f32 to vector<256x128xf32>
    %22 = arith.mulf %21, %20 : vector<256x128xf32>
    %23 = arith.maximumf %20, %22 : vector<256x128xf32>
    %24 = arith.truncf %23 : vector<256x128xf32> to vector<256x128xbf16>
    %c0_10 = arith.constant 0 : index
    %c0_11 = arith.constant 0 : index
    %25 = vector.load %arg4[%c0_10, %c0_11] : memref<128x128xbf16, #tpu.memory_space<vmem>>, vector<128x128xbf16>
    %cst_12 = arith.constant dense<0.000000e+00> : vector<256x128xf32>
    %26 = tpu.matmul %24, %25, %cst_12 {dimension_numbers = #tpu.dot_dimension_numbers<[1], [0], [0], [1], [0, 0, 1, 1], [], []>} : vector<256x128xbf16>, vector<128x128xbf16>, vector<256x128xf32> -> vector<256x128xf32>
    %27 = vector.broadcast %3 : vector<1x128xf32> to vector<256x128xf32>
    %28 = arith.addf %26, %27 : vector<256x128xf32>
    %cst_13 = arith.constant 0.00999999977 : f32
    %29 = vector.broadcast %cst_13 : f32 to vector<256x128xf32>
    %30 = arith.mulf %29, %28 : vector<256x128xf32>
    %31 = arith.maximumf %28, %30 : vector<256x128xf32>
    %32 = arith.truncf %31 : vector<256x128xf32> to vector<256x128xbf16>
    %c0_14 = arith.constant 0 : index
    %c0_15 = arith.constant 0 : index
    %33 = vector.load %arg5[%c0_14, %c0_15] : memref<128x128xbf16, #tpu.memory_space<vmem>>, vector<128x128xbf16>
    %cst_16 = arith.constant dense<0.000000e+00> : vector<256x128xf32>
    %34 = tpu.matmul %32, %33, %cst_16 {dimension_numbers = #tpu.dot_dimension_numbers<[1], [0], [0], [1], [0, 0, 1, 1], [], []>} : vector<256x128xbf16>, vector<128x128xbf16>, vector<256x128xf32> -> vector<256x128xf32>
    %35 = vector.broadcast %4 : vector<1x128xf32> to vector<256x128xf32>
    %36 = arith.addf %34, %35 : vector<256x128xf32>
    %cst_17 = arith.constant dense<0.000000e+00> : vector<256xf32>
    %37 = vector.multi_reduction <add>, %36, %cst_17 [1] : vector<256x128xf32> to vector<256xf32>
    %38 = vector.shape_cast %37 : vector<256xf32> to vector<256x1xf32>
    %cst_18 = arith.constant 1.280000e+02 : f32
    %39 = vector.broadcast %cst_18 : f32 to vector<256x1xf32>
    %40 = arith.divf %38, %39 : vector<256x1xf32>
    %41 = arith.mulf %36, %36 : vector<256x128xf32>
    %cst_19 = arith.constant dense<0.000000e+00> : vector<256xf32>
    %42 = vector.multi_reduction <add>, %41, %cst_19 [1] : vector<256x128xf32> to vector<256xf32>
    %43 = vector.shape_cast %42 : vector<256xf32> to vector<256x1xf32>
    %cst_20 = arith.constant 1.280000e+02 : f32
    %44 = vector.broadcast %cst_20 : f32 to vector<256x1xf32>
    %45 = arith.divf %43, %44 : vector<256x1xf32>
    %46 = arith.mulf %40, %40 : vector<256x1xf32>
    %47 = arith.subf %45, %46 : vector<256x1xf32>
    %cst_21 = arith.constant 0.000000e+00 : f32
    %48 = vector.broadcast %cst_21 : f32 to vector<256x1xf32>
    %49 = arith.maximumf %47, %48 : vector<256x1xf32>
    %50 = vector.broadcast %40 : vector<256x1xf32> to vector<256x128xf32>
    %51 = arith.subf %36, %50 : vector<256x128xf32>
    %cst_22 = arith.constant 9.99999974E-6 : f32
    %52 = vector.broadcast %cst_22 : f32 to vector<256x1xf32>
    %53 = arith.addf %49, %52 : vector<256x1xf32>
    %54 = math.rsqrt %53 : vector<256x1xf32>
    %55 = vector.broadcast %54 : vector<256x1xf32> to vector<256x128xf32>
    %56 = arith.mulf %51, %55 : vector<256x128xf32>
    %57 = vector.broadcast %5 : vector<1x128xf32> to vector<256x128xf32>
    %58 = arith.mulf %56, %57 : vector<256x128xf32>
    %59 = vector.broadcast %6 : vector<1x128xf32> to vector<256x128xf32>
    %60 = arith.addf %58, %59 : vector<256x128xf32>
    %c0_23 = arith.constant 0 : index
    %c0_24 = arith.constant 0 : index
    %61 = vector.load %arg7[%c0_23, %c0_24] : memref<256x128xf32, #tpu.memory_space<vmem>>, vector<256x128xf32>
    tpu.vector_store %arg7[%c0_23, %c0_24], %60 {strides = array<i32>} : memref<256x128xf32, #tpu.memory_space<vmem>>, vector<256x128xf32>,
    return
  }
  func.func @transform_0(%arg0: i32) -> (i32, i32) {
    %c0_i32 = arith.constant 0 : i32
    %c0_i32_0 = arith.constant 0 : i32
    return %arg0, %c0_i32 : i32, i32
  }
  func.func @transform_1(%arg0: i32) -> (i32, i32) {
    %c0_i32 = arith.constant 0 : i32
    %c0_i32_0 = arith.constant 0 : i32
    %c0_i32_1 = arith.constant 0 : i32
    return %c0_i32, %c0_i32_0 : i32, i32
  }
  func.func @transform_2(%arg0: i32) -> (i32, i32) {
    %c0_i32 = arith.constant 0 : i32
    %c0_i32_0 = arith.constant 0 : i32
    %c0_i32_1 = arith.constant 0 : i32
    return %c0_i32, %c0_i32_0 : i32, i32
  }
  func.func @transform_3(%arg0: i32) -> (i32, i32) {
    %c0_i32 = arith.constant 0 : i32
    %c0_i32_0 = arith.constant 0 : i32
    %c0_i32_1 = arith.constant 0 : i32
    return %c0_i32, %c0_i32_0 : i32, i32
  }
  func.func @transform_4(%arg0: i32) -> (i32, i32) {
    %c0_i32 = arith.constant 0 : i32
    %c0_i32_0 = arith.constant 0 : i32
    %c0_i32_1 = arith.constant 0 : i32
    return %c0_i32, %c0_i32_0 : i32, i32
  }
  func.func @transform_5(%arg0: i32) -> (i32, i32) {
    %c0_i32 = arith.constant 0 : i32
    %c0_i32_0 = arith.constant 0 : i32
    %c0_i32_1 = arith.constant 0 : i32
    return %c0_i32, %c0_i32_0 : i32, i32
  }
  func.func @transform_6(%arg0: i32) -> (i32, i32) {
    %c0_i32 = arith.constant 0 : i32
    %c0_i32_0 = arith.constant 0 : i32
    return %arg0, %c0_i32 : i32, i32
  }
}

</mosaic_0001>

<llo_original>
// kernel: tpu_custom_call.1
$region0: #{tpu_custom_call.1}
  #allocation0 [shape = 'u32[]', space=smem, size = 0x4, offset = 0x4, fixed_abs, tag = 'smem constant byte address 0x4 - core index']
  #allocation1 [shape = 'u32[72,128]{1,0:T(1,128)}', space=vmem, size = 0x9000, scoped, tag = 'internal scratch']
  %s0 = inlined_call_operand.vmem [shape: f32[300,26], index: 0, kind: input, shape index: {}]
  %s1 = inlined_call_operand.vmem [shape: bf16[26,128], index: 1, kind: input, shape index: {}]
  %s2 = inlined_call_operand.vmem [shape: bf16[128,128], index: 2, kind: input, shape index: {}]
  %s3 = inlined_call_operand.vmem [shape: bf16[128,128], index: 3, kind: input, shape index: {}]
  %s4 = inlined_call_operand.vmem [shape: bf16[128,128], index: 4, kind: input, shape index: {}]
  %s5 = inlined_call_operand.vmem [shape: f32[8,128], index: 5, kind: input, shape index: {}]
  %s6 = inlined_call_operand.hbm [shape: f32[300,128], index: 6, kind: output, shape index: {}]
  %s7 = sld [smem:[#allocation0]]
  $region57: #{tpu_custom_call.1} parent=0
    _
  %s9 = ssub.s32 1, %s7
  %s10 = scalar_select 0, %s9, %s7
  $region1: #{tpu_custom_call.1} parent=0
    #allocation2 [shape = 'u8[262144]{0}', space=vmem, size = 0x40000, scoped, tag = 'output window, operand 0']
    #allocation3 [shape = 's32[2]{0}', space=sflag, size = 0x8, scoped, tag = 'scoped memory for tpu_custom_call.1']
    %11 = vsyncpa [#allocation3], 0
    %s12 = scalar_lea.sflag [#allocation3], 1
    %13 = vsyncpa %s12, 0
    loop: start=0, step=1, limit=4
    $region2: #{tpu_custom_call.1} parent=1 // loop_pre_header
      _
    $region3: #{tpu_custom_call.1} parent=1 // loop_header
      %s15 = sphi 0, %s19
      %p16 = scmp.ge.s32.totalorder %s15, 4
      %s25 = sphi 0, %s27
      %s28 = sphi 0, %s25
      %s29 = sphi 0, %s28
      %s45 = sphi 0, %s29
      %s49 = sphi 0, %s49
      %s51 = sphi 0, %s49
      %s52 = sphi 0, %s51
      %s66 = sphi 0, %s52
      %s70 = sphi 0, %s70
      %s72 = sphi 0, %s70
      %s73 = sphi 0, %s72
      %s87 = sphi 0, %s73
      %s91 = sphi 0, %s91
      %s93 = sphi 0, %s91
      %s94 = sphi 0, %s93
      %s108 = sphi 0, %s94
      %s112 = sphi 0, %s112
      %s114 = sphi 0, %s112
      %s115 = sphi 0, %s114
      %s129 = sphi 0, %s115
      %s133 = sphi 0, %s133
      %s135 = sphi 0, %s133
      %s136 = sphi 0, %s135
      %s150 = sphi 0, %s136
      %s156 = sphi 0, %s158
      %s159 = sphi 0, %s156
      %s160 = sphi 0, %s159
      %s176 = sphi 0, %s160
    $region4: #{tpu_custom_call.1} parent=1 // loop_header_branch
      %18 = sbr.rel (%p16) target = $region8
    $region5: #{tpu_custom_call.1} parent=1 // loop_body
      %s20 = ssub.s32 %s15, 1
      %s21 = ssub.s32 %s15, 2
      %s22 = sadd.s32 %s15, 1
      %s23 = ssub.s32 %s15, %s22
      %p24 = scmp.eq.s32.totalorder %s23, 0
      %s26 = sadd.s32 %s25, 1
      %s27 = scalar_select %p24, %s25, %s26
      %p30 = pneg %p24
      %p31 = scmp.eq.s32.totalorder %s15, 1
      %p32 = por %p30, %p31
      %p33 = scmp.ne.s32.totalorder %s25, %s28
      %p34 = scmp.eq.s32.totalorder %s15, 0
      %p35 = por %p33, %p34
      %p36 = scmp.ne.s32.totalorder %s25, %s28
      %p37 = scmp.eq.s32.totalorder %s20, 1
      %p38 = por %p36, %p37
      %p39 = scmp.ne.s32.totalorder %s28, %s29
      %p40 = scmp.eq.s32.totalorder %s20, 0
      %p41 = por %p39, %p40
      %p42 = scmp.ne.s32.totalorder %s28, %s29
      %p43 = scmp.eq.s32.totalorder %s21, 1
      %p44 = por %p42, %p43
      %p46 = scmp.ne.s32.totalorder %s29, %s45
      %p47 = scmp.eq.s32.totalorder %s21, 0
      %p48 = por %p46, %p47
      %s50 = sadd.s32 %s49, 1
      %p53 = scmp.eq.s32.totalorder %s15, 1
      %p54 = scmp.ne.s32.totalorder %s49, %s51
      %p55 = scmp.eq.s32.totalorder %s15, 0
      %p56 = por %p54, %p55
      %p57 = scmp.ne.s32.totalorder %s49, %s51
      %p58 = scmp.eq.s32.totalorder %s20, 1
      %p59 = por %p57, %p58
      %p60 = scmp.ne.s32.totalorder %s51, %s52
      %p61 = scmp.eq.s32.totalorder %s20, 0
      %p62 = por %p60, %p61
      %p63 = scmp.ne.s32.totalorder %s51, %s52
      %p64 = scmp.eq.s32.totalorder %s21, 1
      %p65 = por %p63, %p64
      %p67 = scmp.ne.s32.totalorder %s52, %s66
      %p68 = scmp.eq.s32.totalorder %s21, 0
      %p69 = por %p67, %p68
      %s71 = sadd.s32 %s70, 1
      %p74 = scmp.eq.s32.totalorder %s15, 1
      %p75 = scmp.ne.s32.totalorder %s70, %s72
      %p76 = scmp.eq.s32.totalorder %s15, 0
      %p77 = por %p75, %p76
      %p78 = scmp.ne.s32.totalorder %s70, %s72
      %p79 = scmp.eq.s32.totalorder %s20, 1
      %p80 = por %p78, %p79
      %p81 = scmp.ne.s32.totalorder %s72, %s73
      %p82 = scmp.eq.s32.totalorder %s20, 0
      %p83 = por %p81, %p82
      %p84 = scmp.ne.s32.totalorder %s72, %s73
      %p85 = scmp.eq.s32.totalorder %s21, 1
      %p86 = por %p84, %p85
      %p88 = scmp.ne.s32.totalorder %s73, %s87
      %p89 = scmp.eq.s32.totalorder %s21, 0
      %p90 = por %p88, %p89
      %s92 = sadd.s32 %s91, 1
      %p95 = scmp.eq.s32.totalorder %s15, 1
      %p96 = scmp.ne.s32.totalorder %s91, %s93
      %p97 = scmp.eq.s32.totalorder %s15, 0
      %p98 = por %p96, %p97
      %p99 = scmp.ne.s32.totalorder %s91, %s93
      %p100 = scmp.eq.s32.totalorder %s20, 1
      %p101 = por %p99, %p100
      %p102 = scmp.ne.s32.totalorder %s93, %s94
      %p103 = scmp.eq.s32.totalorder %s20, 0
      %p104 = por %p102, %p103
      %p105 = scmp.ne.s32.totalorder %s93, %s94
      %p106 = scmp.eq.s32.totalorder %s21, 1
      %p107 = por %p105, %p106
      %p109 = scmp.ne.s32.totalorder %s94, %s108
      %p110 = scmp.eq.s32.totalorder %s21, 0
      %p111 = por %p109, %p110
      %s113 = sadd.s32 %s112, 1
      %p116 = scmp.eq.s32.totalorder %s15, 1
      %p117 = scmp.ne.s32.totalorder %s112, %s114
      %p118 = scmp.eq.s32.totalorder %s15, 0
      %p119 = por %p117, %p118
      %p120 = scmp.ne.s32.totalorder %s112, %s114
      %p121 = scmp.eq.s32.totalorder %s20, 1
      %p122 = por %p120, %p121
      %p123 = scmp.ne.s32.totalorder %s114, %s115
      %p124 = scmp.eq.s32.totalorder %s20, 0
      %p125 = por %p123, %p124
      %p126 = scmp.ne.s32.totalorder %s114, %s115
      %p127 = scmp.eq.s32.totalorder %s21, 1
      %p128 = por %p126, %p127
      %p130 = scmp.ne.s32.totalorder %s115, %s129
      %p131 = scmp.eq.s32.totalorder %s21, 0
      %p132 = por %p130, %p131
      %s134 = sadd.s32 %s133, 1
      %p137 = scmp.eq.s32.totalorder %s15, 1
      %p138 = scmp.ne.s32.totalorder %s133, %s135
      %p139 = scmp.eq.s32.totalorder %s15, 0
      %p140 = por %p138, %p139
      %p141 = scmp.ne.s32.totalorder %s133, %s135
      %p142 = scmp.eq.s32.totalorder %s20, 1
      %p143 = por %p141, %p142
      %p144 = scmp.ne.s32.totalorder %s135, %s136
      %p145 = scmp.eq.s32.totalorder %s20, 0
      %p146 = por %p144, %p145
      %p147 = scmp.ne.s32.totalorder %s135, %s136
      %p148 = scmp.eq.s32.totalorder %s21, 1
      %p149 = por %p147, %p148
      %p151 = scmp.ne.s32.totalorder %s136, %s150
      %p152 = scmp.eq.s32.totalorder %s21, 0
      %p153 = por %p151, %p152
      %s154 = ssub.s32 %s15, %s22
      %p155 = scmp.eq.s32.totalorder %s154, 0
      %s157 = sadd.s32 %s156, 1
      %s158 = scalar_select %p155, %s156, %s157
      %p161 = pneg %p155
      %p162 = scmp.eq.s32.totalorder %s15, 1
      %p163 = por %p161, %p162
      %p164 = scmp.ne.s32.totalorder %s156, %s159
      %p165 = scmp.eq.s32.totalorder %s15, 0
      %p166 = por %p164, %p165
      %p167 = scmp.ne.s32.totalorder %s156, %s159
      %p168 = scmp.eq.s32.totalorder %s20, 1
      %p169 = por %p167, %p168
      %p170 = scmp.ne.s32.totalorder %s159, %s160
      %p171 = scmp.eq.s32.totalorder %s20, 0
      %p172 = por %p170, %p171
      %p173 = scmp.ne.s32.totalorder %s159, %s160
      %p174 = scmp.eq.s32.totalorder %s21, 1
      %p175 = por %p173, %p174
      %p177 = scmp.ne.s32.totalorder %s160, %s176
      %p178 = scmp.eq.s32.totalorder %s21, 0
      %p179 = por %p177, %p178
      %p180 = scmp.le.s32.totalorder 1, %s15
      %p181 = scmp.lt.s32.totalorder %s15, 3
      %p182 = pnand %p180, %p181
      %p183 = pneg %p182
      // Predicated region
      $region9: #{tpu_custom_call.1} parent=5 // pred_check
        _
      $region10: #{tpu_custom_call.1} parent=5 // pred_check_branch
        %185 = sbr.rel (%p182) target = $region12
      $region11: #{tpu_custom_call.1} parent=5 // pred_region
        %s186 = ssub.s32 %s15, 1
        // Predicated region
        $region13: #{tpu_custom_call.1} parent=11 // pred_check
          %p187 = pneg %p62
        $region14: #{tpu_custom_call.1} parent=11 // pred_check_branch
          %189 = sbr.rel (%p187) target = $region16
        $region15: #{tpu_custom_call.1} parent=11 // pred_region
          _
        $region16: #{tpu_custom_call.1} parent=11 // pred_fallthru
          _
        // Predicated region
        $region17: #{tpu_custom_call.1} parent=11 // pred_check
          %p190 = pneg %p83
        $region18: #{tpu_custom_call.1} parent=11 // pred_check_branch
          %192 = sbr.rel (%p190) target = $region20
        $region19: #{tpu_custom_call.1} parent=11 // pred_region
          _
        $region20: #{tpu_custom_call.1} parent=11 // pred_fallthru
          _
        // Predicated region
        $region21: #{tpu_custom_call.1} parent=11 // pred_check
          %p193 = pneg %p104
        $region22: #{tpu_custom_call.1} parent=11 // pred_check_branch
          %195 = sbr.rel (%p193) target = $region24
        $region23: #{tpu_custom_call.1} parent=11 // pred_region
          _
        $region24: #{tpu_custom_call.1} parent=11 // pred_fallthru
          _
        // Predicated region
        $region25: #{tpu_custom_call.1} parent=11 // pred_check
          %p196 = pneg %p125
        $region26: #{tpu_custom_call.1} parent=11 // pred_check_branch
          %198 = sbr.rel (%p196) target = $region28
        $region27: #{tpu_custom_call.1} parent=11 // pred_region
          _
        $region28: #{tpu_custom_call.1} parent=11 // pred_fallthru
          _
        // Predicated region
        $region29: #{tpu_custom_call.1} parent=11 // pred_check
          %p199 = pneg %p146
        $region30: #{tpu_custom_call.1} parent=11 // pred_check_branch
          %201 = sbr.rel (%p199) target = $region32
        $region31: #{tpu_custom_call.1} parent=11 // pred_region
          _
        $region32: #{tpu_custom_call.1} parent=11 // pred_fallthru
          _
      $region12: #{tpu_custom_call.1} parent=5 // pred_fallthru
        _
      %p202 = scmp.lt.s32.totalorder %s15, 2
      // Predicated region
      $region33: #{tpu_custom_call.1} parent=5 // pred_check
        %p203 = pneg %p202
      $region34: #{tpu_custom_call.1} parent=5 // pred_check_branch
        %205 = sbr.rel (%p203) target = $region36
      $region35: #{tpu_custom_call.1} parent=5 // pred_region
        // Predicated region
        $region37: #{tpu_custom_call.1} parent=35 // pred_check
          %p206 = pneg %p35
        $region38: #{tpu_custom_call.1} parent=35 // pred_check_branch
          %208 = sbr.rel (%p206) target = $region40
        $region39: #{tpu_custom_call.1} parent=35 // pred_region
          %s209 = smul.u32 32, %s15
          %s210 = ssub.s32 38, %s209
          %p211 = scmp.lt.s32.totalorder %s210, 32
          %s212 = scalar_select %p211, %s210, 32
          %s213 = smul.u32 8, %s212
          %p214 = scmp.lt.s32.totalorder %s209, 37
          %s215 = scalar_select %p214, %s209, 37
          %s216 = smul.addr %s215, 8
          %s217 = scalar_lea.vmem %s0, %s216
          %s218 = smul.u32 32, %s15
          %s219 = ssub.s32 38, %s218
          %p220 = scmp.lt.s32.totalorder %s219, 32
          %s221 = scalar_select %p220, %s219, 32
          %s222 = smul.u32 8, %s221
        $region40: #{tpu_custom_call.1} parent=35 // pred_fallthru
          _
      $region36: #{tpu_custom_call.1} parent=5 // pred_fallthru
        _
      %p223 = scmp.le.s32.totalorder 1, %s15
      %p224 = scmp.lt.s32.totalorder %s15, 3
      %p225 = pnand %p223, %p224
      %p226 = pneg %p225
      // Predicated region
      $region41: #{tpu_custom_call.1} parent=5 // pred_check
        _
      $region42: #{tpu_custom_call.1} parent=5 // pred_check_branch
        %228 = sbr.rel (%p225) target = $region44
      $region43: #{tpu_custom_call.1} parent=5 // pred_region
        %s229 = ssub.s32 %s15, 1
        %s230 = smul.u32 32, %s20
        %s231 = ssub.s32 38, %s230
        %p232 = scmp.lt.s32.totalorder %s231, 32
        %s233 = scalar_select %p232, %s231, 32
        %s234 = smul.u32 8, %s233
        %p235 = scmp.lt.s32.totalorder %s230, 37
        %s236 = scalar_select %p235, %s230, 37
        %s237 = smul.addr %s236, 8
        %s238 = scalar_lea.vmem %s0, %s237
        %p239 = pneg %p41
        %p240 = pneg %p38
        %p241 = pneg %p62
        %p242 = pneg %p59
        %p243 = pneg %p83
        %p244 = pneg %p80
        %p245 = pneg %p104
        %p246 = pneg %p101
        %p247 = pneg %p125
        %p248 = pneg %p122
        %p249 = pneg %p146
        %p250 = pneg %p143
        %p251 = pneg %p172
        %p252 = pneg %p169
        %s253 = sand.u32 %s159, 1
        %s254 = scalar_lea.sflag [#allocation3], %s253
        %s255 = sand.u32 %s159, 1
        %s256 = smul.addr %s255, 256
        %s257 = scalar_lea.vmem [#allocation2], %s256
        %s258 = smul.u32 32, %s20
        %s259 = ssub.s32 38, %s258
        %p260 = scmp.lt.s32.totalorder %s259, 32
        %s261 = scalar_select %p260, %s259, 32
        %s262 = smul.u32 8, %s261
        %p263 = scmp.lt.s32.totalorder %s258, 37
        %s264 = scalar_select %p263, %s258, 37
        %s265 = smul.addr %s264, 8
        %s266 = scalar_lea.vmem %s0, %s265
        %s267 = smul.u32 32, %s20
        %s268 = ssub.s32 38, %s267
        %p269 = scmp.lt.s32.totalorder %s268, 32
        %s270 = scalar_select %p269, %s268, 32
        %s271 = smul.u32 8, %s270
        %s272 = smul.u32 32, %s20
        %s273 = ssub.s32 38, %s272
        %p274 = scmp.lt.s32.totalorder %s273, 32
        %s275 = scalar_select %p274, %s273, 32
        %s276 = smul.u32 8, %s275
        %v278 = vld [vmem:[%s5] sm:$0xff]
        %v279 = vld [vmem:[%s266] sm:$0xff]
        %v280 = vld [vmem:[%s266 + $0x8] sm:$0xff]
        %v281 = vld [vmem:[%s266 + $0x10] sm:$0xff]
        %v282 = vld [vmem:[%s266 + $0x18] sm:$0xff]
        %v283 = vld [vmem:[%s266 + $0x20] sm:$0xff]
        %v284 = vld [vmem:[%s266 + $0x28] sm:$0xff]
        %v285 = vld [vmem:[%s266 + $0x30] sm:$0xff]
        %v286 = vld [vmem:[%s266 + $0x38] sm:$0xff]
        %v287 = vld [vmem:[%s266 + $0x40] sm:$0xff]
        %v288 = vld [vmem:[%s266 + $0x48] sm:$0xff]
        %v289 = vld [vmem:[%s266 + $0x50] sm:$0xff]
        %v290 = vld [vmem:[%s266 + $0x58] sm:$0xff]
        %v291 = vld [vmem:[%s266 + $0x60] sm:$0xff]
        %v292 = vld [vmem:[%s266 + $0x68] sm:$0xff]
        %v293 = vld [vmem:[%s266 + $0x70] sm:$0xff]
        %v294 = vld [vmem:[%s266 + $0x78] sm:$0xff]
        %v295 = vld [vmem:[%s266 + $0x80] sm:$0xff]
        %v296 = vld [vmem:[%s266 + $0x88] sm:$0xff]
        %v297 = vld [vmem:[%s266 + $0x90] sm:$0xff]
        %v298 = vld [vmem:[%s266 + $0x98] sm:$0xff]
        %v299 = vld [vmem:[%s266 + $0xa0] sm:$0xff]
        %v300 = vld [vmem:[%s266 + $0xa8] sm:$0xff]
        %v301 = vld [vmem:[%s266 + $0xb0] sm:$0xff]
        %v302 = vld [vmem:[%s266 + $0xb8] sm:$0xff]
        %v303 = vld [vmem:[%s266 + $0xc0] sm:$0xff]
        %v304 = vld [vmem:[%s266 + $0xc8] sm:$0xff]
        %v305 = vld [vmem:[%s266 + $0xd0] sm:$0xff]
        %v306 = vld [vmem:[%s266 + $0xd8] sm:$0xff]
        %v307 = vld [vmem:[%s266 + $0xe0] sm:$0xff]
        %v308 = vld [vmem:[%s266 + $0xe8] sm:$0xff]
        %v309 = vld [vmem:[%s266 + $0xf0] sm:$0xff]
        %v310 = vld [vmem:[%s266 + $0xf8] sm:$0xff]
        %v311 = vpack.c.bf16 %v280, %v279
        %v312 = vpack.c.bf16 %v282, %v281
        %v313 = vpack.c.bf16 %v284, %v283
        %v314 = vpack.c.bf16 %v286, %v285
        %v315 = vpack.c.bf16 %v288, %v287
        %v316 = vpack.c.bf16 %v290, %v289
        %v317 = vpack.c.bf16 %v292, %v291
        %v318 = vpack.c.bf16 %v294, %v293
        %v319 = vpack.c.bf16 %v296, %v295
        %v320 = vpack.c.bf16 %v298, %v297
        %v321 = vpack.c.bf16 %v300, %v299
        %v322 = vpack.c.bf16 %v302, %v301
        %v323 = vpack.c.bf16 %v304, %v303
        %v324 = vpack.c.bf16 %v306, %v305
        %v325 = vpack.c.bf16 %v308, %v307
        %v326 = vpack.c.bf16 %v310, %v309
        %v327 = vld [vmem:[%s1] sm:$0xf]
        %v328 = vld [vmem:[%s1 + $0x4] sm:$0xf]
        %v329 = vld [vmem:[%s1 + $0x8] sm:$0xf]
        %v330 = vld [vmem:[%s1 + $0xc] sm:$0x1]
        %v331 = vperm.slane %v278, 0
        %v336 = vunpack.c.l.b16 %v327
        %v337 = vunpack.c.l.b16 %v328
        %v338 = vunpack.c.l.b16 %v329
        %v339 = vunpack.c.l.b16 %v330
        %v340 = vpack.c.b16 %v337, %v336
        %v341 = vpack.c.b16 %v339, %v338
        %vm343 = vcmask 211968
        %v345 = vsel %vm343, %v311, 0
        %v348 = vsel %vm343, %v312, 0
        %v351 = vsel %vm343, %v313, 0
        %v354 = vsel %vm343, %v314, 0
        %v357 = vsel %vm343, %v315, 0
        %v360 = vsel %vm343, %v316, 0
        %v363 = vsel %vm343, %v317, 0
        %v366 = vsel %vm343, %v318, 0
        %v369 = vsel %vm343, %v319, 0
        %v372 = vsel %vm343, %v320, 0
        %v375 = vsel %vm343, %v321, 0
        %v378 = vsel %vm343, %v322, 0
        %v381 = vsel %vm343, %v323, 0
        %v384 = vsel %vm343, %v324, 0
        %v387 = vsel %vm343, %v325, 0
        %v390 = vsel %vm343, %v326, 0
        %vm392 = vcmask 1044480
        %v394 = vsel %vm392, %v341, 0
        %396 = vmatpush.bf16.msra.mxu0 0
        %397 = vmatpush.bf16.msra.mxu0 0
        %398 = vmatpush.bf16.msra.mxu0 0
        %399 = vmatpush.bf16.msra.mxu0 0
        %400 = vmatpush.bf16.msra.mxu0 0
        %401 = vmatpush.bf16.msra.mxu0 0
        %402 = vmatpush.bf16.msra.mxu0 %v394
        %403 = vmatpush.bf16.msra.mxu0 %v340
        %404 = vmatmul.bf16.gmra.mxu0 %v345
        %v405 = vpop.f32.mrf.mxu0
        %v406 = vadd.f32 %v331, %v405
        %v407 = vpop.f32.mrf.mxu0
        %v408 = vadd.f32 %v331, %v407
        %409 = vmatmul.bf16.gmra.mxu0 %v348
        %v410 = vpop.f32.mrf.mxu0
        %v411 = vadd.f32 %v331, %v410
        %v412 = vpop.f32.mrf.mxu0
        %v413 = vadd.f32 %v331, %v412
        %414 = vmatmul.bf16.gmra.mxu0 %v351
        %v415 = vpop.f32.mrf.mxu0
        %v416 = vadd.f32 %v331, %v415
        %v417 = vpop.f32.mrf.mxu0
        %v418 = vadd.f32 %v331, %v417
        %419 = vmatmul.bf16.gmra.mxu0 %v354
        %v420 = vpop.f32.mrf.mxu0
        %v421 = vadd.f32 %v331, %v420
        %v422 = vpop.f32.mrf.mxu0
        %v423 = vadd.f32 %v331, %v422
        %424 = vmatmul.bf16.gmra.mxu0 %v357
        %v425 = vpop.f32.mrf.mxu0
        %v426 = vadd.f32 %v331, %v425
        %v427 = vpop.f32.mrf.mxu0
        %v428 = vadd.f32 %v331, %v427
        %429 = vmatmul.bf16.gmra.mxu0 %v360
        %v430 = vpop.f32.mrf.mxu0
        %v431 = vadd.f32 %v331, %v430
        %v432 = vpop.f32.mrf.mxu0
        %v433 = vadd.f32 %v331, %v432
        %434 = vmatmul.bf16.gmra.mxu0 %v363
        %v435 = vpop.f32.mrf.mxu0
        %v436 = vadd.f32 %v331, %v435
        %v437 = vpop.f32.mrf.mxu0
        %v438 = vadd.f32 %v331, %v437
        %439 = vmatmul.bf16.gmra.mxu0 %v366
        %v440 = vpop.f32.mrf.mxu0
        %v441 = vadd.f32 %v331, %v440
        %v442 = vpop.f32.mrf.mxu0
        %v443 = vadd.f32 %v331, %v442
        %444 = vmatmul.bf16.gmra.mxu0 %v369
        %v445 = vpop.f32.mrf.mxu0
        %v446 = vadd.f32 %v331, %v445
        %v447 = vpop.f32.mrf.mxu0
        %v448 = vadd.f32 %v331, %v447
        %449 = vmatmul.bf16.gmra.mxu0 %v372
        %v450 = vpop.f32.mrf.mxu0
        %v451 = vadd.f32 %v331, %v450
        %v452 = vpop.f32.mrf.mxu0
        %v453 = vadd.f32 %v331, %v452
        %454 = vmatmul.bf16.gmra.mxu0 %v375
        %v455 = vpop.f32.mrf.mxu0
        %v456 = vadd.f32 %v331, %v455
        %v457 = vpop.f32.mrf.mxu0
        %v458 = vadd.f32 %v331, %v457
        %459 = vmatmul.bf16.gmra.mxu0 %v378
        %v460 = vpop.f32.mrf.mxu0
        %v461 = vadd.f32 %v331, %v460
        %v462 = vpop.f32.mrf.mxu0
        %v463 = vadd.f32 %v331, %v462
        %464 = vmatmul.bf16.gmra.mxu0 %v381
        %v465 = vpop.f32.mrf.mxu0
        %v466 = vadd.f32 %v331, %v465
        %v467 = vpop.f32.mrf.mxu0
        %v468 = vadd.f32 %v331, %v467
        %469 = vmatmul.bf16.gmra.mxu0 %v384
        %v470 = vpop.f32.mrf.mxu0
        %v471 = vadd.f32 %v331, %v470
        %v472 = vpop.f32.mrf.mxu0
        %v473 = vadd.f32 %v331, %v472
        %474 = vmatmul.bf16.gmra.mxu0 %v387
        %v475 = vpop.f32.mrf.mxu0
        %v476 = vadd.f32 %v331, %v475
        %v477 = vpop.f32.mrf.mxu0
        %v478 = vadd.f32 %v331, %v477
        %479 = vmatmul.bf16.gmra.mxu0 %v390
        %v480 = vpop.f32.mrf.mxu0
        %v481 = vadd.f32 %v331, %v480
        %v482 = vpop.f32.mrf.mxu0
        %v483 = vadd.f32 %v331, %v482
        %484 = vdwg.mxu0
        %v485 = vmul.f32 %v406, 0.01
        %v486 = vmul.f32 %v408, 0.01
        %v487 = vmul.f32 %v411, 0.01
        %v488 = vmul.f32 %v413, 0.01
        %v489 = vmul.f32 %v416, 0.01
        %v490 = vmul.f32 %v418, 0.01
        %v491 = vmul.f32 %v421, 0.01
        %v492 = vmul.f32 %v423, 0.01
        %v493 = vmul.f32 %v426, 0.01
        %v494 = vmul.f32 %v428, 0.01
        %v495 = vmul.f32 %v431, 0.01
        %v496 = vmul.f32 %v433, 0.01
        %v497 = vmul.f32 %v436, 0.01
        %v498 = vmul.f32 %v438, 0.01
        %v499 = vmul.f32 %v441, 0.01
        %v500 = vmul.f32 %v443, 0.01
        %v501 = vmul.f32 %v446, 0.01
        %v502 = vmul.f32 %v448, 0.01
        %v503 = vmul.f32 %v451, 0.01
        %v504 = vmul.f32 %v453, 0.01
        %v505 = vmul.f32 %v456, 0.01
        %v506 = vmul.f32 %v458, 0.01
        %v507 = vmul.f32 %v461, 0.01
        %v508 = vmul.f32 %v463, 0.01
        %v509 = vmul.f32 %v466, 0.01
        %v510 = vmul.f32 %v468, 0.01
        %v511 = vmul.f32 %v471, 0.01
        %v512 = vmul.f32 %v473, 0.01
        %v513 = vmul.f32 %v476, 0.01
        %v514 = vmul.f32 %v478, 0.01
        %v515 = vmul.f32 %v481, 0.01
        %v516 = vmul.f32 %v483, 0.01
        %v517 = vmax.f32 %v406, %v485
        %v518 = vmax.f32 %v408, %v486
        %v519 = vmax.f32 %v411, %v487
        %v520 = vmax.f32 %v413, %v488
        %v521 = vmax.f32 %v416, %v489
        %v522 = vmax.f32 %v418, %v490
        %v523 = vmax.f32 %v421, %v491
        %v524 = vmax.f32 %v423, %v492
        %v525 = vmax.f32 %v426, %v493
        %v526 = vmax.f32 %v428, %v494
        %v527 = vmax.f32 %v431, %v495
        %v528 = vmax.f32 %v433, %v496
        %v529 = vmax.f32 %v436, %v497
        %v530 = vmax.f32 %v438, %v498
        %v531 = vmax.f32 %v441, %v499
        %v532 = vmax.f32 %v443, %v500
        %v533 = vmax.f32 %v446, %v501
        %v534 = vmax.f32 %v448, %v502
        %v535 = vmax.f32 %v451, %v503
        %v536 = vmax.f32 %v453, %v504
        %v537 = vmax.f32 %v456, %v505
        %v538 = vmax.f32 %v458, %v506
        %v539 = vmax.f32 %v461, %v507
        %v540 = vmax.f32 %v463, %v508
        %v541 = vmax.f32 %v466, %v509
        %v542 = vmax.f32 %v468, %v510
        %v543 = vmax.f32 %v471, %v511
        %v544 = vmax.f32 %v473, %v512
        %v545 = vmax.f32 %v476, %v513
        %v546 = vmax.f32 %v478, %v514
        %v547 = vmax.f32 %v481, %v515
        %v548 = vmax.f32 %v483, %v516
        %v549 = vpack.c.bf16 %v518, %v517
        %v550 = vpack.c.bf16 %v520, %v519
        %v551 = vpack.c.bf16 %v522, %v521
        %v552 = vpack.c.bf16 %v524, %v523
        %v553 = vpack.c.bf16 %v526, %v525
        %v554 = vpack.c.bf16 %v528, %v527
        %v555 = vpack.c.bf16 %v530, %v529
        %v556 = vpack.c.bf16 %v532, %v531
        %v557 = vpack.c.bf16 %v534, %v533
        %v558 = vpack.c.bf16 %v536, %v535
        %v559 = vpack.c.bf16 %v538, %v537
        %v560 = vpack.c.bf16 %v540, %v539
        %v561 = vpack.c.bf16 %v542, %v541
        %v562 = vpack.c.bf16 %v544, %v543
        %v563 = vpack.c.bf16 %v546, %v545
        %v564 = vpack.c.bf16 %v548, %v547
        %v565 = vld [vmem:[%s2] sm:$0xf]
        %v566 = vld [vmem:[%s2 + $0x4] sm:$0xf]
        %v567 = vld [vmem:[%s2 + $0x8] sm:$0xf]
        %v568 = vld [vmem:[%s2 + $0xc] sm:$0xf]
        %v569 = vld [vmem:[%s2 + $0x10] sm:$0xf]
        %v570 = vld [vmem:[%s2 + $0x14] sm:$0xf]
        %v571 = vld [vmem:[%s2 + $0x18] sm:$0xf]
        %v572 = vld [vmem:[%s2 + $0x1c] sm:$0xf]
        %v573 = vld [vmem:[%s2 + $0x20] sm:$0xf]
        %v574 = vld [vmem:[%s2 + $0x24] sm:$0xf]
        %v575 = vld [vmem:[%s2 + $0x28] sm:$0xf]
        %v576 = vld [vmem:[%s2 + $0x2c] sm:$0xf]
        %v577 = vld [vmem:[%s2 + $0x30] sm:$0xf]
        %v578 = vld [vmem:[%s2 + $0x34] sm:$0xf]
        %v579 = vld [vmem:[%s2 + $0x38] sm:$0xf]
        %v580 = vld [vmem:[%s2 + $0x3c] sm:$0xf]
        %v581 = vperm.slane %v278, 1
        %v598 = vunpack.c.l.b16 %v565
        %v599 = vunpack.c.l.b16 %v566
        %v600 = vunpack.c.l.b16 %v567
        %v601 = vunpack.c.l.b16 %v568
        %v602 = vunpack.c.l.b16 %v569
        %v603 = vunpack.c.l.b16 %v570
        %v604 = vunpack.c.l.b16 %v571
        %v605 = vunpack.c.l.b16 %v572
        %v606 = vunpack.c.l.b16 %v573
        %v607 = vunpack.c.l.b16 %v574
        %v608 = vunpack.c.l.b16 %v575
        %v609 = vunpack.c.l.b16 %v576
        %v610 = vunpack.c.l.b16 %v577
        %v611 = vunpack.c.l.b16 %v578
        %v612 = vunpack.c.l.b16 %v579
        %v613 = vunpack.c.l.b16 %v580
        %v614 = vpack.c.b16 %v599, %v598
        %v615 = vpack.c.b16 %v601, %v600
        %v616 = vpack.c.b16 %v603, %v602
        %v617 = vpack.c.b16 %v605, %v604
        %v618 = vpack.c.b16 %v607, %v606
        %v619 = vpack.c.b16 %v609, %v608
        %v620 = vpack.c.b16 %v611, %v610
        %v621 = vpack.c.b16 %v613, %v612
        %630 = vmatpush.bf16.msra.mxu0 %v621
        %631 = vmatpush.bf16.msra.mxu0 %v620
        %632 = vmatpush.bf16.msra.mxu0 %v619
        %633 = vmatpush.bf16.msra.mxu0 %v618
        %634 = vmatpush.bf16.msra.mxu0 %v617
        %635 = vmatpush.bf16.msra.mxu0 %v616
        %636 = vmatpush.bf16.msra.mxu0 %v615
        %637 = vmatpush.bf16.msra.mxu0 %v614
        %638 = vmatmul.bf16.gmra.mxu0 %v549
        %v639 = vpop.f32.mrf.mxu0
        %v640 = vadd.f32 %v581, %v639
        %v641 = vpop.f32.mrf.mxu0
        %v642 = vadd.f32 %v581, %v641
        %643 = vmatmul.bf16.gmra.mxu0 %v550
        %v644 = vpop.f32.mrf.mxu0
        %v645 = vadd.f32 %v581, %v644
        %v646 = vpop.f32.mrf.mxu0
        %v647 = vadd.f32 %v581, %v646
        %648 = vmatmul.bf16.gmra.mxu0 %v551
        %v649 = vpop.f32.mrf.mxu0
        %v650 = vadd.f32 %v581, %v649
        %v651 = vpop.f32.mrf.mxu0
        %v652 = vadd.f32 %v581, %v651
        %653 = vmatmul.bf16.gmra.mxu0 %v552
        %v654 = vpop.f32.mrf.mxu0
        %v655 = vadd.f32 %v581, %v654
        %v656 = vpop.f32.mrf.mxu0
        %v657 = vadd.f32 %v581, %v656
        %658 = vmatmul.bf16.gmra.mxu0 %v553
        %v659 = vpop.f32.mrf.mxu0
        %v660 = vadd.f32 %v581, %v659
        %v661 = vpop.f32.mrf.mxu0
        %v662 = vadd.f32 %v581, %v661
        %663 = vmatmul.bf16.gmra.mxu0 %v554
        %v664 = vpop.f32.mrf.mxu0
        %v665 = vadd.f32 %v581, %v664
        %v666 = vpop.f32.mrf.mxu0
        %v667 = vadd.f32 %v581, %v666
        %668 = vmatmul.bf16.gmra.mxu0 %v555
        %v669 = vpop.f32.mrf.mxu0
        %v670 = vadd.f32 %v581, %v669
        %v671 = vpop.f32.mrf.mxu0
        %v672 = vadd.f32 %v581, %v671
        %673 = vmatmul.bf16.gmra.mxu0 %v556
        %v674 = vpop.f32.mrf.mxu0
        %v675 = vadd.f32 %v581, %v674
        %v676 = vpop.f32.mrf.mxu0
        %v677 = vadd.f32 %v581, %v676
        %678 = vmatmul.bf16.gmra.mxu0 %v557
        %v679 = vpop.f32.mrf.mxu0
        %v680 = vadd.f32 %v581, %v679
        %v681 = vpop.f32.mrf.mxu0
        %v682 = vadd.f32 %v581, %v681
        %683 = vmatmul.bf16.gmra.mxu0 %v558
        %v684 = vpop.f32.mrf.mxu0
        %v685 = vadd.f32 %v581, %v684
        %v686 = vpop.f32.mrf.mxu0
        %v687 = vadd.f32 %v581, %v686
        %688 = vmatmul.bf16.gmra.mxu0 %v559
        %v689 = vpop.f32.mrf.mxu0
        %v690 = vadd.f32 %v581, %v689
        %v691 = vpop.f32.mrf.mxu0
        %v692 = vadd.f32 %v581, %v691
        %693 = vmatmul.bf16.gmra.mxu0 %v560
        %v694 = vpop.f32.mrf.mxu0
        %v695 = vadd.f32 %v581, %v694
        %v696 = vpop.f32.mrf.mxu0
        %v697 = vadd.f32 %v581, %v696
        %698 = vmatmul.bf16.gmra.mxu0 %v561
        %v699 = vpop.f32.mrf.mxu0
        %v700 = vadd.f32 %v581, %v699
        %v701 = vpop.f32.mrf.mxu0
        %v702 = vadd.f32 %v581, %v701
        %703 = vmatmul.bf16.gmra.mxu0 %v562
        %v704 = vpop.f32.mrf.mxu0
        %v705 = vadd.f32 %v581, %v704
        %v706 = vpop.f32.mrf.mxu0
        %v707 = vadd.f32 %v581, %v706
        %708 = vmatmul.bf16.gmra.mxu0 %v563
        %v709 = vpop.f32.mrf.mxu0
        %v710 = vadd.f32 %v581, %v709
        %v711 = vpop.f32.mrf.mxu0
        %v712 = vadd.f32 %v581, %v711
        %713 = vmatmul.bf16.gmra.mxu0 %v564
        %v714 = vpop.f32.mrf.mxu0
        %v715 = vadd.f32 %v581, %v714
        %v716 = vpop.f32.mrf.mxu0
        %v717 = vadd.f32 %v581, %v716
        %718 = vdwg.mxu0
        %v719 = vmul.f32 %v640, 0.01
        %v720 = vmul.f32 %v642, 0.01
        %v721 = vmul.f32 %v645, 0.01
        %v722 = vmul.f32 %v647, 0.01
        %v723 = vmul.f32 %v650, 0.01
        %v724 = vmul.f32 %v652, 0.01
        %v725 = vmul.f32 %v655, 0.01
        %v726 = vmul.f32 %v657, 0.01
        %v727 = vmul.f32 %v660, 0.01
        %v728 = vmul.f32 %v662, 0.01
        %v729 = vmul.f32 %v665, 0.01
        %v730 = vmul.f32 %v667, 0.01
        %v731 = vmul.f32 %v670, 0.01
        %v732 = vmul.f32 %v672, 0.01
        %v733 = vmul.f32 %v675, 0.01
        %v734 = vmul.f32 %v677, 0.01
        %v735 = vmul.f32 %v680, 0.01
        %v736 = vmul.f32 %v682, 0.01
        %v737 = vmul.f32 %v685, 0.01
        %v738 = vmul.f32 %v687, 0.01
        %v739 = vmul.f32 %v690, 0.01
        %v740 = vmul.f32 %v692, 0.01
        %v741 = vmul.f32 %v695, 0.01
        %v742 = vmul.f32 %v697, 0.01
        %v743 = vmul.f32 %v700, 0.01
        %v744 = vmul.f32 %v702, 0.01
        %v745 = vmul.f32 %v705, 0.01
        %v746 = vmul.f32 %v707, 0.01
        %v747 = vmul.f32 %v710, 0.01
        %v748 = vmul.f32 %v712, 0.01
        %v749 = vmul.f32 %v715, 0.01
        %v750 = vmul.f32 %v717, 0.01
        %v751 = vmax.f32 %v640, %v719
        %v752 = vmax.f32 %v642, %v720
        %v753 = vmax.f32 %v645, %v721
        %v754 = vmax.f32 %v647, %v722
        %v755 = vmax.f32 %v650, %v723
        %v756 = vmax.f32 %v652, %v724
        %v757 = vmax.f32 %v655, %v725
        %v758 = vmax.f32 %v657, %v726
        %v759 = vmax.f32 %v660, %v727
        %v760 = vmax.f32 %v662, %v728
        %v761 = vmax.f32 %v665, %v729
        %v762 = vmax.f32 %v667, %v730
        %v763 = vmax.f32 %v670, %v731
        %v764 = vmax.f32 %v672, %v732
        %v765 = vmax.f32 %v675, %v733
        %v766 = vmax.f32 %v677, %v734
        %v767 = vmax.f32 %v680, %v735
        %v768 = vmax.f32 %v682, %v736
        %v769 = vmax.f32 %v685, %v737
        %v770 = vmax.f32 %v687, %v738
        %v771 = vmax.f32 %v690, %v739
        %v772 = vmax.f32 %v692, %v740
        %v773 = vmax.f32 %v695, %v741
        %v774 = vmax.f32 %v697, %v742
        %v775 = vmax.f32 %v700, %v743
        %v776 = vmax.f32 %v702, %v744
        %v777 = vmax.f32 %v705, %v745
        %v778 = vmax.f32 %v707, %v746
        %v779 = vmax.f32 %v710, %v747
        %v780 = vmax.f32 %v712, %v748
        %v781 = vmax.f32 %v715, %v749
        %v782 = vmax.f32 %v717, %v750
        %v783 = vpack.c.bf16 %v752, %v751
        %v784 = vpack.c.bf16 %v754, %v753
        %v785 = vpack.c.bf16 %v756, %v755
        %v786 = vpack.c.bf16 %v758, %v757
        %v787 = vpack.c.bf16 %v760, %v759
        %v788 = vpack.c.bf16 %v762, %v761
        %v789 = vpack.c.bf16 %v764, %v763
        %v790 = vpack.c.bf16 %v766, %v765
        %v791 = vpack.c.bf16 %v768, %v767
        %v792 = vpack.c.bf16 %v770, %v769
        %v793 = vpack.c.bf16 %v772, %v771
        %v794 = vpack.c.bf16 %v774, %v773
        %v795 = vpack.c.bf16 %v776, %v775
        %v796 = vpack.c.bf16 %v778, %v777
        %v797 = vpack.c.bf16 %v780, %v779
        %v798 = vpack.c.bf16 %v782, %v781
        %v799 = vld [vmem:[%s3] sm:$0xf]
        %v800 = vld [vmem:[%s3 + $0x4] sm:$0xf]
        %v801 = vld [vmem:[%s3 + $0x8] sm:$0xf]
        %v802 = vld [vmem:[%s3 + $0xc] sm:$0xf]
        %v803 = vld [vmem:[%s3 + $0x10] sm:$0xf]
        %v804 = vld [vmem:[%s3 + $0x14] sm:$0xf]
        %v805 = vld [vmem:[%s3 + $0x18] sm:$0xf]
        %v806 = vld [vmem:[%s3 + $0x1c] sm:$0xf]
        %v807 = vld [vmem:[%s3 + $0x20] sm:$0xf]
        %v808 = vld [vmem:[%s3 + $0x24] sm:$0xf]
        %v809 = vld [vmem:[%s3 + $0x28] sm:$0xf]
        %v810 = vld [vmem:[%s3 + $0x2c] sm:$0xf]
        %v811 = vld [vmem:[%s3 + $0x30] sm:$0xf]
        %v812 = vld [vmem:[%s3 + $0x34] sm:$0xf]
        %v813 = vld [vmem:[%s3 + $0x38] sm:$0xf]
        %v814 = vld [vmem:[%s3 + $0x3c] sm:$0xf]
        %v815 = vperm.slane %v278, 2
        %v832 = vunpack.c.l.b16 %v799
        %v833 = vunpack.c.l.b16 %v800
        %v834 = vunpack.c.l.b16 %v801
        %v835 = vunpack.c.l.b16 %v802
        %v836 = vunpack.c.l.b16 %v803
        %v837 = vunpack.c.l.b16 %v804
        %v838 = vunpack.c.l.b16 %v805
        %v839 = vunpack.c.l.b16 %v806
        %v840 = vunpack.c.l.b16 %v807
        %v841 = vunpack.c.l.b16 %v808
        %v842 = vunpack.c.l.b16 %v809
        %v843 = vunpack.c.l.b16 %v810
        %v844 = vunpack.c.l.b16 %v811
        %v845 = vunpack.c.l.b16 %v812
        %v846 = vunpack.c.l.b16 %v813
        %v847 = vunpack.c.l.b16 %v814
        %v848 = vpack.c.b16 %v833, %v832
        %v849 = vpack.c.b16 %v835, %v834
        %v850 = vpack.c.b16 %v837, %v836
        %v851 = vpack.c.b16 %v839, %v838
        %v852 = vpack.c.b16 %v841, %v840
        %v853 = vpack.c.b16 %v843, %v842
        %v854 = vpack.c.b16 %v845, %v844
        %v855 = vpack.c.b16 %v847, %v846
        %864 = vmatpush.bf16.msra.mxu0 %v855
        %865 = vmatpush.bf16.msra.mxu0 %v854
        %866 = vmatpush.bf16.msra.mxu0 %v853
        %867 = vmatpush.bf16.msra.mxu0 %v852
        %868 = vmatpush.bf16.msra.mxu0 %v851
        %869 = vmatpush.bf16.msra.mxu0 %v850
        %870 = vmatpush.bf16.msra.mxu0 %v849
        %871 = vmatpush.bf16.msra.mxu0 %v848
        %872 = vmatmul.bf16.gmra.mxu0 %v783
        %v873 = vpop.f32.mrf.mxu0
        %v874 = vadd.f32 %v815, %v873
        %v875 = vpop.f32.mrf.mxu0
        %v876 = vadd.f32 %v815, %v875
        %877 = vmatmul.bf16.gmra.mxu0 %v784
        %v878 = vpop.f32.mrf.mxu0
        %v879 = vadd.f32 %v815, %v878
        %v880 = vpop.f32.mrf.mxu0
        %v881 = vadd.f32 %v815, %v880
        %882 = vmatmul.bf16.gmra.mxu0 %v785
        %v883 = vpop.f32.mrf.mxu0
        %v884 = vadd.f32 %v815, %v883
        %v885 = vpop.f32.mrf.mxu0
        %v886 = vadd.f32 %v815, %v885
        %887 = vmatmul.bf16.gmra.mxu0 %v786
        %v888 = vpop.f32.mrf.mxu0
        %v889 = vadd.f32 %v815, %v888
        %v890 = vpop.f32.mrf.mxu0
        %v891 = vadd.f32 %v815, %v890
        %892 = vmatmul.bf16.gmra.mxu0 %v787
        %v893 = vpop.f32.mrf.mxu0
        %v894 = vadd.f32 %v815, %v893
        %v895 = vpop.f32.mrf.mxu0
        %v896 = vadd.f32 %v815, %v895
        %897 = vmatmul.bf16.gmra.mxu0 %v788
        %v898 = vpop.f32.mrf.mxu0
        %v899 = vadd.f32 %v815, %v898
        %v900 = vpop.f32.mrf.mxu0
        %v901 = vadd.f32 %v815, %v900
        %902 = vmatmul.bf16.gmra.mxu0 %v789
        %v903 = vpop.f32.mrf.mxu0
        %v904 = vadd.f32 %v815, %v903
        %v905 = vpop.f32.mrf.mxu0
        %v906 = vadd.f32 %v815, %v905
        %907 = vmatmul.bf16.gmra.mxu0 %v790
        %v908 = vpop.f32.mrf.mxu0
        %v909 = vadd.f32 %v815, %v908
        %v910 = vpop.f32.mrf.mxu0
        %v911 = vadd.f32 %v815, %v910
        %912 = vmatmul.bf16.gmra.mxu0 %v791
        %v913 = vpop.f32.mrf.mxu0
        %v914 = vadd.f32 %v815, %v913
        %v915 = vpop.f32.mrf.mxu0
        %v916 = vadd.f32 %v815, %v915
        %917 = vmatmul.bf16.gmra.mxu0 %v792
        %v918 = vpop.f32.mrf.mxu0
        %v919 = vadd.f32 %v815, %v918
        %v920 = vpop.f32.mrf.mxu0
        %v921 = vadd.f32 %v815, %v920
        %922 = vmatmul.bf16.gmra.mxu0 %v793
        %v923 = vpop.f32.mrf.mxu0
        %v924 = vadd.f32 %v815, %v923
        %v925 = vpop.f32.mrf.mxu0
        %v926 = vadd.f32 %v815, %v925
        %927 = vmatmul.bf16.gmra.mxu0 %v794
        %v928 = vpop.f32.mrf.mxu0
        %v929 = vadd.f32 %v815, %v928
        %v930 = vpop.f32.mrf.mxu0
        %v931 = vadd.f32 %v815, %v930
        %932 = vmatmul.bf16.gmra.mxu0 %v795
        %v933 = vpop.f32.mrf.mxu0
        %v934 = vadd.f32 %v815, %v933
        %v935 = vpop.f32.mrf.mxu0
        %v936 = vadd.f32 %v815, %v935
        %937 = vmatmul.bf16.gmra.mxu0 %v796
        %v938 = vpop.f32.mrf.mxu0
        %v939 = vadd.f32 %v815, %v938
        %v940 = vpop.f32.mrf.mxu0
        %v941 = vadd.f32 %v815, %v940
        %942 = vmatmul.bf16.gmra.mxu0 %v797
        %v943 = vpop.f32.mrf.mxu0
        %v944 = vadd.f32 %v815, %v943
        %v945 = vpop.f32.mrf.mxu0
        %v946 = vadd.f32 %v815, %v945
        %947 = vmatmul.bf16.gmra.mxu0 %v798
        %v948 = vpop.f32.mrf.mxu0
        %v949 = vadd.f32 %v815, %v948
        %v950 = vpop.f32.mrf.mxu0
        %v951 = vadd.f32 %v815, %v950
        %952 = vdwg.mxu0
        %v953 = vmul.f32 %v874, 0.01
        %v954 = vmul.f32 %v876, 0.01
        %v955 = vmul.f32 %v879, 0.01
        %v956 = vmul.f32 %v881, 0.01
        %v957 = vmul.f32 %v884, 0.01
        %v958 = vmul.f32 %v886, 0.01
        %v959 = vmul.f32 %v889, 0.01
        %v960 = vmul.f32 %v891, 0.01
        %v961 = vmul.f32 %v894, 0.01
        %v962 = vmul.f32 %v896, 0.01
        %v963 = vmul.f32 %v899, 0.01
        %v964 = vmul.f32 %v901, 0.01
        %v965 = vmul.f32 %v904, 0.01
        %v966 = vmul.f32 %v906, 0.01
        %v967 = vmul.f32 %v909, 0.01
        %v968 = vmul.f32 %v911, 0.01
        %v969 = vmul.f32 %v914, 0.01
        %v970 = vmul.f32 %v916, 0.01
        %v971 = vmul.f32 %v919, 0.01
        %v972 = vmul.f32 %v921, 0.01
        %v973 = vmul.f32 %v924, 0.01
        %v974 = vmul.f32 %v926, 0.01
        %v975 = vmul.f32 %v929, 0.01
        %v976 = vmul.f32 %v931, 0.01
        %v977 = vmul.f32 %v934, 0.01
        %v978 = vmul.f32 %v936, 0.01
        %v979 = vmul.f32 %v939, 0.01
        %v980 = vmul.f32 %v941, 0.01
        %v981 = vmul.f32 %v944, 0.01
        %v982 = vmul.f32 %v946, 0.01
        %v983 = vmul.f32 %v949, 0.01
        %v984 = vmul.f32 %v951, 0.01
        %v985 = vmax.f32 %v874, %v953
        %v986 = vmax.f32 %v876, %v954
        %v987 = vmax.f32 %v879, %v955
        %v988 = vmax.f32 %v881, %v956
        %v989 = vmax.f32 %v884, %v957
        %v990 = vmax.f32 %v886, %v958
        %v991 = vmax.f32 %v889, %v959
        %v992 = vmax.f32 %v891, %v960
        %v993 = vmax.f32 %v894, %v961
        %v994 = vmax.f32 %v896, %v962
        %v995 = vmax.f32 %v899, %v963
        %v996 = vmax.f32 %v901, %v964
        %v997 = vmax.f32 %v904, %v965
        %v998 = vmax.f32 %v906, %v966
        %v999 = vmax.f32 %v909, %v967
        %v1000 = vmax.f32 %v911, %v968
        %v1001 = vmax.f32 %v914, %v969
        %v1002 = vmax.f32 %v916, %v970
        %v1003 = vmax.f32 %v919, %v971
        %v1004 = vmax.f32 %v921, %v972
        %v1005 = vmax.f32 %v924, %v973
        %v1006 = vmax.f32 %v926, %v974
        %v1007 = vmax.f32 %v929, %v975
        %v1008 = vmax.f32 %v931, %v976
        %v1009 = vmax.f32 %v934, %v977
        %v1010 = vmax.f32 %v936, %v978
        %v1011 = vmax.f32 %v939, %v979
        %v1012 = vmax.f32 %v941, %v980
        %v1013 = vmax.f32 %v944, %v981
        %v1014 = vmax.f32 %v946, %v982
        %v1015 = vmax.f32 %v949, %v983
        %v1016 = vmax.f32 %v951, %v984
        %v1017 = vpack.c.bf16 %v986, %v985
        %v1018 = vpack.c.bf16 %v988, %v987
        %v1019 = vpack.c.bf16 %v990, %v989
        %v1020 = vpack.c.bf16 %v992, %v991
        %v1021 = vpack.c.bf16 %v994, %v993
        %v1022 = vpack.c.bf16 %v996, %v995
        %v1023 = vpack.c.bf16 %v998, %v997
        %v1024 = vpack.c.bf16 %v1000, %v999
        %v1025 = vpack.c.bf16 %v1002, %v1001
        %v1026 = vpack.c.bf16 %v1004, %v1003
        %v1027 = vpack.c.bf16 %v1006, %v1005
        %v1028 = vpack.c.bf16 %v1008, %v1007
        %v1029 = vpack.c.bf16 %v1010, %v1009
        %v1030 = vpack.c.bf16 %v1012, %v1011
        %v1031 = vpack.c.bf16 %v1014, %v1013
        %v1032 = vpack.c.bf16 %v1016, %v1015
        %v1033 = vld [vmem:[%s4] sm:$0xf]
        %v1034 = vld [vmem:[%s4 + $0x4] sm:$0xf]
        %v1035 = vld [vmem:[%s4 + $0x8] sm:$0xf]
        %v1036 = vld [vmem:[%s4 + $0xc] sm:$0xf]
        %v1037 = vld [vmem:[%s4 + $0x10] sm:$0xf]
        %v1038 = vld [vmem:[%s4 + $0x14] sm:$0xf]
        %v1039 = vld [vmem:[%s4 + $0x18] sm:$0xf]
        %v1040 = vld [vmem:[%s4 + $0x1c] sm:$0xf]
        %v1041 = vld [vmem:[%s4 + $0x20] sm:$0xf]
        %v1042 = vld [vmem:[%s4 + $0x24] sm:$0xf]
        %v1043 = vld [vmem:[%s4 + $0x28] sm:$0xf]
        %v1044 = vld [vmem:[%s4 + $0x2c] sm:$0xf]
        %v1045 = vld [vmem:[%s4 + $0x30] sm:$0xf]
        %v1046 = vld [vmem:[%s4 + $0x34] sm:$0xf]
        %v1047 = vld [vmem:[%s4 + $0x38] sm:$0xf]
        %v1048 = vld [vmem:[%s4 + $0x3c] sm:$0xf]
        %v1049 = vperm.slane %v278, 3
        %v1066 = vunpack.c.l.b16 %v1033
        %v1067 = vunpack.c.l.b16 %v1034
        %v1068 = vunpack.c.l.b16 %v1035
        %v1069 = vunpack.c.l.b16 %v1036
        %v1070 = vunpack.c.l.b16 %v1037
        %v1071 = vunpack.c.l.b16 %v1038
        %v1072 = vunpack.c.l.b16 %v1039
        %v1073 = vunpack.c.l.b16 %v1040
        %v1074 = vunpack.c.l.b16 %v1041
        %v1075 = vunpack.c.l.b16 %v1042
        %v1076 = vunpack.c.l.b16 %v1043
        %v1077 = vunpack.c.l.b16 %v1044
        %v1078 = vunpack.c.l.b16 %v1045
        %v1079 = vunpack.c.l.b16 %v1046
        %v1080 = vunpack.c.l.b16 %v1047
        %v1081 = vunpack.c.l.b16 %v1048
        %v1082 = vpack.c.b16 %v1067, %v1066
        %v1083 = vpack.c.b16 %v1069, %v1068
        %v1084 = vpack.c.b16 %v1071, %v1070
        %v1085 = vpack.c.b16 %v1073, %v1072
        %v1086 = vpack.c.b16 %v1075, %v1074
        %v1087 = vpack.c.b16 %v1077, %v1076
        %v1088 = vpack.c.b16 %v1079, %v1078
        %v1089 = vpack.c.b16 %v1081, %v1080
        %1098 = vmatpush.bf16.msra.mxu0 %v1089
        %1099 = vmatpush.bf16.msra.mxu0 %v1088
        %1100 = vmatpush.bf16.msra.mxu0 %v1087
        %1101 = vmatpush.bf16.msra.mxu0 %v1086
        %1102 = vmatpush.bf16.msra.mxu0 %v1085
        %1103 = vmatpush.bf16.msra.mxu0 %v1084
        %1104 = vmatpush.bf16.msra.mxu0 %v1083
        %1105 = vmatpush.bf16.msra.mxu0 %v1082
        %1106 = vmatmul.bf16.gmra.mxu0 %v1017
        %v1107 = vpop.f32.mrf.mxu0
        %v1108 = vadd.f32 %v1049, %v1107
        %v1109 = vpop.f32.mrf.mxu0
        %v1110 = vadd.f32 %v1049, %v1109
        %1111 = vmatmul.bf16.gmra.mxu0 %v1018
        %v1112 = vpop.f32.mrf.mxu0
        %v1113 = vadd.f32 %v1049, %v1112
        %v1114 = vpop.f32.mrf.mxu0
        %v1115 = vadd.f32 %v1049, %v1114
        %1116 = vmatmul.bf16.gmra.mxu0 %v1019
        %v1117 = vpop.f32.mrf.mxu0
        %v1118 = vadd.f32 %v1049, %v1117
        %v1119 = vpop.f32.mrf.mxu0
        %v1120 = vadd.f32 %v1049, %v1119
        %1121 = vmatmul.bf16.gmra.mxu0 %v1020
        %v1122 = vpop.f32.mrf.mxu0
        %v1123 = vadd.f32 %v1049, %v1122
        %v1124 = vpop.f32.mrf.mxu0
        %v1125 = vadd.f32 %v1049, %v1124
        %1126 = vmatmul.bf16.gmra.mxu0 %v1021
        %v1127 = vpop.f32.mrf.mxu0
        %v1128 = vadd.f32 %v1049, %v1127
        %v1129 = vpop.f32.mrf.mxu0
        %v1130 = vadd.f32 %v1049, %v1129
        %1131 = vmatmul.bf16.gmra.mxu0 %v1022
        %v1132 = vpop.f32.mrf.mxu0
        %v1133 = vadd.f32 %v1049, %v1132
        %v1134 = vpop.f32.mrf.mxu0
        %v1135 = vadd.f32 %v1049, %v1134
        %1136 = vmatmul.bf16.gmra.mxu0 %v1023
        %v1137 = vpop.f32.mrf.mxu0
        %v1138 = vadd.f32 %v1049, %v1137
        %v1139 = vpop.f32.mrf.mxu0
        %v1140 = vadd.f32 %v1049, %v1139
        %1141 = vmatmul.bf16.gmra.mxu0 %v1024
        %v1142 = vpop.f32.mrf.mxu0
        %v1143 = vadd.f32 %v1049, %v1142
        %v1144 = vpop.f32.mrf.mxu0
        %v1145 = vadd.f32 %v1049, %v1144
        %1146 = vmatmul.bf16.gmra.mxu0 %v1025
        %v1147 = vpop.f32.mrf.mxu0
        %v1148 = vadd.f32 %v1049, %v1147
        %v1149 = vpop.f32.mrf.mxu0
        %v1150 = vadd.f32 %v1049, %v1149
        %1151 = vmatmul.bf16.gmra.mxu0 %v1026
        %v1152 = vpop.f32.mrf.mxu0
        %v1153 = vadd.f32 %v1049, %v1152
        %v1154 = vpop.f32.mrf.mxu0
        %v1155 = vadd.f32 %v1049, %v1154
        %1156 = vmatmul.bf16.gmra.mxu0 %v1027
        %v1157 = vpop.f32.mrf.mxu0
        %v1158 = vadd.f32 %v1049, %v1157
        %v1159 = vpop.f32.mrf.mxu0
        %v1160 = vadd.f32 %v1049, %v1159
        %1161 = vmatmul.bf16.gmra.mxu0 %v1028
        %v1162 = vpop.f32.mrf.mxu0
        %v1163 = vadd.f32 %v1049, %v1162
        %v1164 = vpop.f32.mrf.mxu0
        %v1165 = vadd.f32 %v1049, %v1164
        %1166 = vmatmul.bf16.gmra.mxu0 %v1029
        %v1167 = vpop.f32.mrf.mxu0
        %v1168 = vadd.f32 %v1049, %v1167
        %v1169 = vpop.f32.mrf.mxu0
        %v1170 = vadd.f32 %v1049, %v1169
        %1171 = vmatmul.bf16.gmra.mxu0 %v1030
        %v1172 = vpop.f32.mrf.mxu0
        %v1173 = vadd.f32 %v1049, %v1172
        %v1174 = vpop.f32.mrf.mxu0
        %v1175 = vadd.f32 %v1049, %v1174
        %1176 = vmatmul.bf16.gmra.mxu0 %v1031
        %v1177 = vpop.f32.mrf.mxu0
        %v1178 = vadd.f32 %v1049, %v1177
        %v1179 = vpop.f32.mrf.mxu0
        %v1180 = vadd.f32 %v1049, %v1179
        %1181 = vmatmul.bf16.gmra.mxu0 %v1032
        %v1182 = vpop.f32.mrf.mxu0
        %v1183 = vadd.f32 %v1049, %v1182
        %v1184 = vpop.f32.mrf.mxu0
        %v1185 = vadd.f32 %v1049, %v1184
        %1186 = vdwg.mxu0
        %1187 = vadd.xlane.f32.xlu0 %v1108
        %v1188 = vpop.xlane.xlu0 %1187
        %1189 = vadd.xlane.f32.xlu0 %v1110
        %v1190 = vpop.xlane.xlu0 %1189
        %1191 = vadd.xlane.f32.xlu0 %v1113
        %v1192 = vpop.xlane.xlu0 %1191
        %1193 = vadd.xlane.f32.xlu0 %v1115
        %v1194 = vpop.xlane.xlu0 %1193
        %1195 = vadd.xlane.f32.xlu0 %v1118
        %v1196 = vpop.xlane.xlu0 %1195
        %1197 = vadd.xlane.f32.xlu0 %v1120
        %v1198 = vpop.xlane.xlu0 %1197
        %1199 = vadd.xlane.f32.xlu0 %v1123
        %v1200 = vpop.xlane.xlu0 %1199
        %1201 = vadd.xlane.f32.xlu0 %v1125
        %v1202 = vpop.xlane.xlu0 %1201
        %1203 = vadd.xlane.f32.xlu0 %v1128
        %v1204 = vpop.xlane.xlu0 %1203
        %1205 = vadd.xlane.f32.xlu0 %v1130
        %v1206 = vpop.xlane.xlu0 %1205
        %1207 = vadd.xlane.f32.xlu0 %v1133
        %v1208 = vpop.xlane.xlu0 %1207
        %1209 = vadd.xlane.f32.xlu0 %v1135
        %v1210 = vpop.xlane.xlu0 %1209
        %1211 = vadd.xlane.f32.xlu0 %v1138
        %v1212 = vpop.xlane.xlu0 %1211
        %1213 = vadd.xlane.f32.xlu0 %v1140
        %v1214 = vpop.xlane.xlu0 %1213
        %1215 = vadd.xlane.f32.xlu0 %v1143
        %v1216 = vpop.xlane.xlu0 %1215
        %1217 = vadd.xlane.f32.xlu0 %v1145
        %v1218 = vpop.xlane.xlu0 %1217
        %1219 = vadd.xlane.f32.xlu0 %v1148
        %v1220 = vpop.xlane.xlu0 %1219
        %1221 = vadd.xlane.f32.xlu0 %v1150
        %v1222 = vpop.xlane.xlu0 %1221
        %1223 = vadd.xlane.f32.xlu0 %v1153
        %v1224 = vpop.xlane.xlu0 %1223
        %1225 = vadd.xlane.f32.xlu0 %v1155
        %v1226 = vpop.xlane.xlu0 %1225
        %1227 = vadd.xlane.f32.xlu0 %v1158
        %v1228 = vpop.xlane.xlu0 %1227
        %1229 = vadd.xlane.f32.xlu0 %v1160
        %v1230 = vpop.xlane.xlu0 %1229
        %1231 = vadd.xlane.f32.xlu0 %v1163
        %v1232 = vpop.xlane.xlu0 %1231
        %1233 = vadd.xlane.f32.xlu0 %v1165
        %v1234 = vpop.xlane.xlu0 %1233
        %1235 = vadd.xlane.f32.xlu0 %v1168
        %v1236 = vpop.xlane.xlu0 %1235
        %1237 = vadd.xlane.f32.xlu0 %v1170
        %v1238 = vpop.xlane.xlu0 %1237
        %1239 = vadd.xlane.f32.xlu0 %v1173
        %v1240 = vpop.xlane.xlu0 %1239
        %1241 = vadd.xlane.f32.xlu0 %v1175
        %v1242 = vpop.xlane.xlu0 %1241
        %1243 = vadd.xlane.f32.xlu0 %v1178
        %v1244 = vpop.xlane.xlu0 %1243
        %1245 = vadd.xlane.f32.xlu0 %v1180
        %v1246 = vpop.xlane.xlu0 %1245
        %1247 = vadd.xlane.f32.xlu0 %v1183
        %v1248 = vpop.xlane.xlu0 %1247
        %1249 = vadd.xlane.f32.xlu0 %v1185
        %v1250 = vpop.xlane.xlu0 %1249
        %v1251 = vrcp.pop 128.0
        %v1252 = vmul.f32 128.0, %v1251
        %v1253 = vsub.f32 1.0, %v1252
        %v1254 = vmul.f32 %v1251, %v1253
        %v1255 = vadd.f32 %v1251, %v1254
        %vm1256 = vweird.f32 %v1251
        %v1257 = vsel %vm1256, %v1251, %v1255
        %v1258 = vmul.f32 %v1188, %v1257
        %v1259 = vmul.f32 %v1190, %v1257
        %v1260 = vmul.f32 %v1192, %v1257
        %v1261 = vmul.f32 %v1194, %v1257
        %v1262 = vmul.f32 %v1196, %v1257
        %v1263 = vmul.f32 %v1198, %v1257
        %v1264 = vmul.f32 %v1200, %v1257
        %v1265 = vmul.f32 %v1202, %v1257
        %v1266 = vmul.f32 %v1204, %v1257
        %v1267 = vmul.f32 %v1206, %v1257
        %v1268 = vmul.f32 %v1208, %v1257
        %v1269 = vmul.f32 %v1210, %v1257
        %v1270 = vmul.f32 %v1212, %v1257
        %v1271 = vmul.f32 %v1214, %v1257
        %v1272 = vmul.f32 %v1216, %v1257
        %v1273 = vmul.f32 %v1218, %v1257
        %v1274 = vmul.f32 %v1220, %v1257
        %v1275 = vmul.f32 %v1222, %v1257
        %v1276 = vmul.f32 %v1224, %v1257
        %v1277 = vmul.f32 %v1226, %v1257
        %v1278 = vmul.f32 %v1228, %v1257
        %v1279 = vmul.f32 %v1230, %v1257
        %v1280 = vmul.f32 %v1232, %v1257
        %v1281 = vmul.f32 %v1234, %v1257
        %v1282 = vmul.f32 %v1236, %v1257
        %v1283 = vmul.f32 %v1238, %v1257
        %v1284 = vmul.f32 %v1240, %v1257
        %v1285 = vmul.f32 %v1242, %v1257
        %v1286 = vmul.f32 %v1244, %v1257
        %v1287 = vmul.f32 %v1246, %v1257
        %v1288 = vmul.f32 %v1248, %v1257
        %v1289 = vmul.f32 %v1250, %v1257
        %v1290 = vmul.f32 %v1108, %v1108
        %v1291 = vmul.f32 %v1110, %v1110
        %v1292 = vmul.f32 %v1113, %v1113
        %v1293 = vmul.f32 %v1115, %v1115
        %v1294 = vmul.f32 %v1118, %v1118
        %v1295 = vmul.f32 %v1120, %v1120
        %v1296 = vmul.f32 %v1123, %v1123
        %v1297 = vmul.f32 %v1125, %v1125
        %v1298 = vmul.f32 %v1128, %v1128
        %v1299 = vmul.f32 %v1130, %v1130
        %v1300 = vmul.f32 %v1133, %v1133
        %v1301 = vmul.f32 %v1135, %v1135
        %v1302 = vmul.f32 %v1138, %v1138
        %v1303 = vmul.f32 %v1140, %v1140
        %v1304 = vmul.f32 %v1143, %v1143
        %v1305 = vmul.f32 %v1145, %v1145
        %v1306 = vmul.f32 %v1148, %v1148
        %v1307 = vmul.f32 %v1150, %v1150
        %v1308 = vmul.f32 %v1153, %v1153
        %v1309 = vmul.f32 %v1155, %v1155
        %v1310 = vmul.f32 %v1158, %v1158
        %v1311 = vmul.f32 %v1160, %v1160
        %v1312 = vmul.f32 %v1163, %v1163
        %v1313 = vmul.f32 %v1165, %v1165
        %v1314 = vmul.f32 %v1168, %v1168
        %v1315 = vmul.f32 %v1170, %v1170
        %v1316 = vmul.f32 %v1173, %v1173
        %v1317 = vmul.f32 %v1175, %v1175
        %v1318 = vmul.f32 %v1178, %v1178
        %v1319 = vmul.f32 %v1180, %v1180
        %v1320 = vmul.f32 %v1183, %v1183
        %v1321 = vmul.f32 %v1185, %v1185
        %1322 = vadd.xlane.f32.xlu0 %v1290
        %v1323 = vpop.xlane.xlu0 %1322
        %1324 = vadd.xlane.f32.xlu0 %v1291
        %v1325 = vpop.xlane.xlu0 %1324
        %1326 = vadd.xlane.f32.xlu0 %v1292
        %v1327 = vpop.xlane.xlu0 %1326
        %1328 = vadd.xlane.f32.xlu0 %v1293
        %v1329 = vpop.xlane.xlu0 %1328
        %1330 = vadd.xlane.f32.xlu0 %v1294
        %v1331 = vpop.xlane.xlu0 %1330
        %1332 = vadd.xlane.f32.xlu0 %v1295
        %v1333 = vpop.xlane.xlu0 %1332
        %1334 = vadd.xlane.f32.xlu0 %v1296
        %v1335 = vpop.xlane.xlu0 %1334
        %1336 = vadd.xlane.f32.xlu0 %v1297
        %v1337 = vpop.xlane.xlu0 %1336
        %1338 = vadd.xlane.f32.xlu0 %v1298
        %v1339 = vpop.xlane.xlu0 %1338
        %1340 = vadd.xlane.f32.xlu0 %v1299
        %v1341 = vpop.xlane.xlu0 %1340
        %1342 = vadd.xlane.f32.xlu0 %v1300
        %v1343 = vpop.xlane.xlu0 %1342
        %1344 = vadd.xlane.f32.xlu0 %v1301
        %v1345 = vpop.xlane.xlu0 %1344
        %1346 = vadd.xlane.f32.xlu0 %v1302
        %v1347 = vpop.xlane.xlu0 %1346
        %1348 = vadd.xlane.f32.xlu0 %v1303
        %v1349 = vpop.xlane.xlu0 %1348
        %1350 = vadd.xlane.f32.xlu0 %v1304
        %v1351 = vpop.xlane.xlu0 %1350
        %1352 = vadd.xlane.f32.xlu0 %v1305
        %v1353 = vpop.xlane.xlu0 %1352
        %1354 = vadd.xlane.f32.xlu0 %v1306
        %v1355 = vpop.xlane.xlu0 %1354
        %1356 = vadd.xlane.f32.xlu0 %v1307
        %v1357 = vpop.xlane.xlu0 %1356
        %1358 = vadd.xlane.f32.xlu0 %v1308
        %v1359 = vpop.xlane.xlu0 %1358
        %1360 = vadd.xlane.f32.xlu0 %v1309
        %v1361 = vpop.xlane.xlu0 %1360
        %1362 = vadd.xlane.f32.xlu0 %v1310
        %v1363 = vpop.xlane.xlu0 %1362
        %1364 = vadd.xlane.f32.xlu0 %v1311
        %v1365 = vpop.xlane.xlu0 %1364
        %1366 = vadd.xlane.f32.xlu0 %v1312
        %v1367 = vpop.xlane.xlu0 %1366
        %1368 = vadd.xlane.f32.xlu0 %v1313
        %v1369 = vpop.xlane.xlu0 %1368
        %1370 = vadd.xlane.f32.xlu0 %v1314
        %v1371 = vpop.xlane.xlu0 %1370
        %1372 = vadd.xlane.f32.xlu0 %v1315
        %v1373 = vpop.xlane.xlu0 %1372
        %1374 = vadd.xlane.f32.xlu0 %v1316
        %v1375 = vpop.xlane.xlu0 %1374
        %1376 = vadd.xlane.f32.xlu0 %v1317
        %v1377 = vpop.xlane.xlu0 %1376
        %1378 = vadd.xlane.f32.xlu0 %v1318
        %v1379 = vpop.xlane.xlu0 %1378
        %1380 = vadd.xlane.f32.xlu0 %v1319
        %v1381 = vpop.xlane.xlu0 %1380
        %1382 = vadd.xlane.f32.xlu0 %v1320
        %v1383 = vpop.xlane.xlu0 %1382
        %1384 = vadd.xlane.f32.xlu0 %v1321
        %v1385 = vpop.xlane.xlu0 %1384
        %v1386 = vmul.f32 %v1323, %v1257
        %v1387 = vmul.f32 %v1325, %v1257
        %v1388 = vmul.f32 %v1327, %v1257
        %v1389 = vmul.f32 %v1329, %v1257
        %v1390 = vmul.f32 %v1331, %v1257
        %v1391 = vmul.f32 %v1333, %v1257
        %v1392 = vmul.f32 %v1335, %v1257
        %v1393 = vmul.f32 %v1337, %v1257
        %v1394 = vmul.f32 %v1339, %v1257
        %v1395 = vmul.f32 %v1341, %v1257
        %v1396 = vmul.f32 %v1343, %v1257
        %v1397 = vmul.f32 %v1345, %v1257
        %v1398 = vmul.f32 %v1347, %v1257
        %v1399 = vmul.f32 %v1349, %v1257
        %v1400 = vmul.f32 %v1351, %v1257
        %v1401 = vmul.f32 %v1353, %v1257
        %v1402 = vmul.f32 %v1355, %v1257
        %v1403 = vmul.f32 %v1357, %v1257
        %v1404 = vmul.f32 %v1359, %v1257
        %v1405 = vmul.f32 %v1361, %v1257
        %v1406 = vmul.f32 %v1363, %v1257
        %v1407 = vmul.f32 %v1365, %v1257
        %v1408 = vmul.f32 %v1367, %v1257
        %v1409 = vmul.f32 %v1369, %v1257
        %v1410 = vmul.f32 %v1371, %v1257
        %v1411 = vmul.f32 %v1373, %v1257
        %v1412 = vmul.f32 %v1375, %v1257
        %v1413 = vmul.f32 %v1377, %v1257
        %v1414 = vmul.f32 %v1379, %v1257
        %v1415 = vmul.f32 %v1381, %v1257
        %v1416 = vmul.f32 %v1383, %v1257
        %v1417 = vmul.f32 %v1385, %v1257
        %v1418 = vmul.f32 %v1258, %v1258
        %v1419 = vmul.f32 %v1259, %v1259
        %v1420 = vmul.f32 %v1260, %v1260
        %v1421 = vmul.f32 %v1261, %v1261
        %v1422 = vmul.f32 %v1262, %v1262
        %v1423 = vmul.f32 %v1263, %v1263
        %v1424 = vmul.f32 %v1264, %v1264
        %v1425 = vmul.f32 %v1265, %v1265
        %v1426 = vmul.f32 %v1266, %v1266
        %v1427 = vmul.f32 %v1267, %v1267
        %v1428 = vmul.f32 %v1268, %v1268
        %v1429 = vmul.f32 %v1269, %v1269
        %v1430 = vmul.f32 %v1270, %v1270
        %v1431 = vmul.f32 %v1271, %v1271
        %v1432 = vmul.f32 %v1272, %v1272
        %v1433 = vmul.f32 %v1273, %v1273
        %v1434 = vmul.f32 %v1274, %v1274
        %v1435 = vmul.f32 %v1275, %v1275
        %v1436 = vmul.f32 %v1276, %v1276
        %v1437 = vmul.f32 %v1277, %v1277
        %v1438 = vmul.f32 %v1278, %v1278
        %v1439 = vmul.f32 %v1279, %v1279
        %v1440 = vmul.f32 %v1280, %v1280
        %v1441 = vmul.f32 %v1281, %v1281
        %v1442 = vmul.f32 %v1282, %v1282
        %v1443 = vmul.f32 %v1283, %v1283
        %v1444 = vmul.f32 %v1284, %v1284
        %v1445 = vmul.f32 %v1285, %v1285
        %v1446 = vmul.f32 %v1286, %v1286
        %v1447 = vmul.f32 %v1287, %v1287
        %v1448 = vmul.f32 %v1288, %v1288
        %v1449 = vmul.f32 %v1289, %v1289
        %v1450 = vsub.f32 %v1386, %v1418
        %v1451 = vsub.f32 %v1387, %v1419
        %v1452 = vsub.f32 %v1388, %v1420
        %v1453 = vsub.f32 %v1389, %v1421
        %v1454 = vsub.f32 %v1390, %v1422
        %v1455 = vsub.f32 %v1391, %v1423
        %v1456 = vsub.f32 %v1392, %v1424
        %v1457 = vsub.f32 %v1393, %v1425
        %v1458 = vsub.f32 %v1394, %v1426
        %v1459 = vsub.f32 %v1395, %v1427
        %v1460 = vsub.f32 %v1396, %v1428
        %v1461 = vsub.f32 %v1397, %v1429
        %v1462 = vsub.f32 %v1398, %v1430
        %v1463 = vsub.f32 %v1399, %v1431
        %v1464 = vsub.f32 %v1400, %v1432
        %v1465 = vsub.f32 %v1401, %v1433
        %v1466 = vsub.f32 %v1402, %v1434
        %v1467 = vsub.f32 %v1403, %v1435
        %v1468 = vsub.f32 %v1404, %v1436
        %v1469 = vsub.f32 %v1405, %v1437
        %v1470 = vsub.f32 %v1406, %v1438
        %v1471 = vsub.f32 %v1407, %v1439
        %v1472 = vsub.f32 %v1408, %v1440
        %v1473 = vsub.f32 %v1409, %v1441
        %v1474 = vsub.f32 %v1410, %v1442
        %v1475 = vsub.f32 %v1411, %v1443
        %v1476 = vsub.f32 %v1412, %v1444
        %v1477 = vsub.f32 %v1413, %v1445
        %v1478 = vsub.f32 %v1414, %v1446
        %v1479 = vsub.f32 %v1415, %v1447
        %v1480 = vsub.f32 %v1416, %v1448
        %v1481 = vsub.f32 %v1417, %v1449
        %v1482 = vmax.f32 %v1450, 0.0
        %v1483 = vmax.f32 %v1451, 0.0
        %v1484 = vmax.f32 %v1452, 0.0
        %v1485 = vmax.f32 %v1453, 0.0
        %v1486 = vmax.f32 %v1454, 0.0
        %v1487 = vmax.f32 %v1455, 0.0
        %v1488 = vmax.f32 %v1456, 0.0
        %v1489 = vmax.f32 %v1457, 0.0
        %v1490 = vmax.f32 %v1458, 0.0
        %v1491 = vmax.f32 %v1459, 0.0
        %v1492 = vmax.f32 %v1460, 0.0
        %v1493 = vmax.f32 %v1461, 0.0
        %v1494 = vmax.f32 %v1462, 0.0
        %v1495 = vmax.f32 %v1463, 0.0
        %v1496 = vmax.f32 %v1464, 0.0
        %v1497 = vmax.f32 %v1465, 0.0
        %v1498 = vmax.f32 %v1466, 0.0
        %v1499 = vmax.f32 %v1467, 0.0
        %v1500 = vmax.f32 %v1468, 0.0
        %v1501 = vmax.f32 %v1469, 0.0
        %v1502 = vmax.f32 %v1470, 0.0
        %v1503 = vmax.f32 %v1471, 0.0
        %v1504 = vmax.f32 %v1472, 0.0
        %v1505 = vmax.f32 %v1473, 0.0
        %v1506 = vmax.f32 %v1474, 0.0
        %v1507 = vmax.f32 %v1475, 0.0
        %v1508 = vmax.f32 %v1476, 0.0
        %v1509 = vmax.f32 %v1477, 0.0
        %v1510 = vmax.f32 %v1478, 0.0
        %v1511 = vmax.f32 %v1479, 0.0
        %v1512 = vmax.f32 %v1480, 0.0
        %v1513 = vmax.f32 %v1481, 0.0
        %v1514 = vsub.f32 %v1108, %v1258
        %v1515 = vsub.f32 %v1110, %v1259
        %v1516 = vsub.f32 %v1113, %v1260
        %v1517 = vsub.f32 %v1115, %v1261
        %v1518 = vsub.f32 %v1118, %v1262
        %v1519 = vsub.f32 %v1120, %v1263
        %v1520 = vsub.f32 %v1123, %v1264
        %v1521 = vsub.f32 %v1125, %v1265
        %v1522 = vsub.f32 %v1128, %v1266
        %v1523 = vsub.f32 %v1130, %v1267
        %v1524 = vsub.f32 %v1133, %v1268
        %v1525 = vsub.f32 %v1135, %v1269
        %v1526 = vsub.f32 %v1138, %v1270
        %v1527 = vsub.f32 %v1140, %v1271
        %v1528 = vsub.f32 %v1143, %v1272
        %v1529 = vsub.f32 %v1145, %v1273
        %v1530 = vsub.f32 %v1148, %v1274
        %v1531 = vsub.f32 %v1150, %v1275
        %v1532 = vsub.f32 %v1153, %v1276
        %v1533 = vsub.f32 %v1155, %v1277
        %v1534 = vsub.f32 %v1158, %v1278
        %v1535 = vsub.f32 %v1160, %v1279
        %v1536 = vsub.f32 %v1163, %v1280
        %v1537 = vsub.f32 %v1165, %v1281
        %v1538 = vsub.f32 %v1168, %v1282
        %v1539 = vsub.f32 %v1170, %v1283
        %v1540 = vsub.f32 %v1173, %v1284
        %v1541 = vsub.f32 %v1175, %v1285
        %v1542 = vsub.f32 %v1178, %v1286
        %v1543 = vsub.f32 %v1180, %v1287
        %v1544 = vsub.f32 %v1183, %v1288
        %v1545 = vsub.f32 %v1185, %v1289
        %v1546 = vadd.f32 %v1482, 1e-05
        %v1547 = vadd.f32 %v1483, 1e-05
        %v1548 = vadd.f32 %v1484, 1e-05
        %v1549 = vadd.f32 %v1485, 1e-05
        %v1550 = vadd.f32 %v1486, 1e-05
        %v1551 = vadd.f32 %v1487, 1e-05
        %v1552 = vadd.f32 %v1488, 1e-05
        %v1553 = vadd.f32 %v1489, 1e-05
        %v1554 = vadd.f32 %v1490, 1e-05
        %v1555 = vadd.f32 %v1491, 1e-05
        %v1556 = vadd.f32 %v1492, 1e-05
        %v1557 = vadd.f32 %v1493, 1e-05
        %v1558 = vadd.f32 %v1494, 1e-05
        %v1559 = vadd.f32 %v1495, 1e-05
        %v1560 = vadd.f32 %v1496, 1e-05
        %v1561 = vadd.f32 %v1497, 1e-05
        %v1562 = vadd.f32 %v1498, 1e-05
        %v1563 = vadd.f32 %v1499, 1e-05
        %v1564 = vadd.f32 %v1500, 1e-05
        %v1565 = vadd.f32 %v1501, 1e-05
        %v1566 = vadd.f32 %v1502, 1e-05
        %v1567 = vadd.f32 %v1503, 1e-05
        %v1568 = vadd.f32 %v1504, 1e-05
        %v1569 = vadd.f32 %v1505, 1e-05
        %v1570 = vadd.f32 %v1506, 1e-05
        %v1571 = vadd.f32 %v1507, 1e-05
        %v1572 = vadd.f32 %v1508, 1e-05
        %v1573 = vadd.f32 %v1509, 1e-05
        %v1574 = vadd.f32 %v1510, 1e-05
        %v1575 = vadd.f32 %v1511, 1e-05
        %v1576 = vadd.f32 %v1512, 1e-05
        %v1577 = vadd.f32 %v1513, 1e-05
        %v1578 = vrsqrt.pop %v1546
        %v1579 = vmul.f32 %v1578, %v1546
        %v1580 = vmul.f32 %v1579, %v1578
        %v1581 = vmul.f32 0.5, %v1580
        %v1582 = vsub.f32 1.5, %v1581
        %v1583 = vmul.f32 %v1578, %v1582
        %vm1584 = vweird.f32 %v1546
        %vm1585 = vweird.f32 %v1578
        %vm1586 = vmor %vm1584, %vm1585
        %v1587 = vsel %vm1586, %v1578, %v1583
        %v1588 = vrsqrt.pop %v1547
        %v1589 = vmul.f32 %v1588, %v1547
        %v1590 = vmul.f32 %v1589, %v1588
        %v1591 = vmul.f32 0.5, %v1590
        %v1592 = vsub.f32 1.5, %v1591
        %v1593 = vmul.f32 %v1588, %v1592
        %vm1594 = vweird.f32 %v1547
        %vm1595 = vweird.f32 %v1588
        %vm1596 = vmor %vm1594, %vm1595
        %v1597 = vsel %vm1596, %v1588, %v1593
        %v1598 = vrsqrt.pop %v1548
        %v1599 = vmul.f32 %v1598, %v1548
        %v1600 = vmul.f32 %v1599, %v1598
        %v1601 = vmul.f32 0.5, %v1600
        %v1602 = vsub.f32 1.5, %v1601
        %v1603 = vmul.f32 %v1598, %v1602
        %vm1604 = vweird.f32 %v1548
        %vm1605 = vweird.f32 %v1598
        %vm1606 = vmor %vm1604, %vm1605
        %v1607 = vsel %vm1606, %v1598, %v1603
        %v1608 = vrsqrt.pop %v1549
        %v1609 = vmul.f32 %v1608, %v1549
        %v1610 = vmul.f32 %v1609, %v1608
        %v1611 = vmul.f32 0.5, %v1610
        %v1612 = vsub.f32 1.5, %v1611
        %v1613 = vmul.f32 %v1608, %v1612
        %vm1614 = vweird.f32 %v1549
        %vm1615 = vweird.f32 %v1608
        %vm1616 = vmor %vm1614, %vm1615
        %v1617 = vsel %vm1616, %v1608, %v1613
        %v1618 = vrsqrt.pop %v1550
        %v1619 = vmul.f32 %v1618, %v1550
        %v1620 = vmul.f32 %v1619, %v1618
        %v1621 = vmul.f32 0.5, %v1620
        %v1622 = vsub.f32 1.5, %v1621
        %v1623 = vmul.f32 %v1618, %v1622
        %vm1624 = vweird.f32 %v1550
        %vm1625 = vweird.f32 %v1618
        %vm1626 = vmor %vm1624, %vm1625
        %v1627 = vsel %vm1626, %v1618, %v1623
        %v1628 = vrsqrt.pop %v1551
        %v1629 = vmul.f32 %v1628, %v1551
        %v1630 = vmul.f32 %v1629, %v1628
        %v1631 = vmul.f32 0.5, %v1630
        %v1632 = vsub.f32 1.5, %v1631
        %v1633 = vmul.f32 %v1628, %v1632
        %vm1634 = vweird.f32 %v1551
        %vm1635 = vweird.f32 %v1628
        %vm1636 = vmor %vm1634, %vm1635
        %v1637 = vsel %vm1636, %v1628, %v1633
        %v1638 = vrsqrt.pop %v1552
        %v1639 = vmul.f32 %v1638, %v1552
        %v1640 = vmul.f32 %v1639, %v1638
        %v1641 = vmul.f32 0.5, %v1640
        %v1642 = vsub.f32 1.5, %v1641
        %v1643 = vmul.f32 %v1638, %v1642
        %vm1644 = vweird.f32 %v1552
        %vm1645 = vweird.f32 %v1638
        %vm1646 = vmor %vm1644, %vm1645
        %v1647 = vsel %vm1646, %v1638, %v1643
        %v1648 = vrsqrt.pop %v1553
        %v1649 = vmul.f32 %v1648, %v1553
        %v1650 = vmul.f32 %v1649, %v1648
        %v1651 = vmul.f32 0.5, %v1650
        %v1652 = vsub.f32 1.5, %v1651
        %v1653 = vmul.f32 %v1648, %v1652
        %vm1654 = vweird.f32 %v1553
        %vm1655 = vweird.f32 %v1648
        %vm1656 = vmor %vm1654, %vm1655
        %v1657 = vsel %vm1656, %v1648, %v1653
        %v1658 = vrsqrt.pop %v1554
        %v1659 = vmul.f32 %v1658, %v1554
        %v1660 = vmul.f32 %v1659, %v1658
        %v1661 = vmul.f32 0.5, %v1660
        %v1662 = vsub.f32 1.5, %v1661
        %v1663 = vmul.f32 %v1658, %v1662
        %vm1664 = vweird.f32 %v1554
        %vm1665 = vweird.f32 %v1658
        %vm1666 = vmor %vm1664, %vm1665
        %v1667 = vsel %vm1666, %v1658, %v1663
        %v1668 = vrsqrt.pop %v1555
        %v1669 = vmul.f32 %v1668, %v1555
        %v1670 = vmul.f32 %v1669, %v1668
        %v1671 = vmul.f32 0.5, %v1670
        %v1672 = vsub.f32 1.5, %v1671
        %v1673 = vmul.f32 %v1668, %v1672
        %vm1674 = vweird.f32 %v1555
        %vm1675 = vweird.f32 %v1668
        %vm1676 = vmor %vm1674, %vm1675
        %v1677 = vsel %vm1676, %v1668, %v1673
        %v1678 = vrsqrt.pop %v1556
        %v1679 = vmul.f32 %v1678, %v1556
        %v1680 = vmul.f32 %v1679, %v1678
        %v1681 = vmul.f32 0.5, %v1680
        %v1682 = vsub.f32 1.5, %v1681
        %v1683 = vmul.f32 %v1678, %v1682
        %vm1684 = vweird.f32 %v1556
        %vm1685 = vweird.f32 %v1678
        %vm1686 = vmor %vm1684, %vm1685
        %v1687 = vsel %vm1686, %v1678, %v1683
        %v1688 = vrsqrt.pop %v1557
        %v1689 = vmul.f32 %v1688, %v1557
        %v1690 = vmul.f32 %v1689, %v1688
        %v1691 = vmul.f32 0.5, %v1690
        %v1692 = vsub.f32 1.5, %v1691
        %v1693 = vmul.f32 %v1688, %v1692
        %vm1694 = vweird.f32 %v1557
        %vm1695 = vweird.f32 %v1688
        %vm1696 = vmor %vm1694, %vm1695
        %v1697 = vsel %vm1696, %v1688, %v1693
        %v1698 = vrsqrt.pop %v1558
        %v1699 = vmul.f32 %v1698, %v1558
        %v1700 = vmul.f32 %v1699, %v1698
        %v1701 = vmul.f32 0.5, %v1700
        %v1702 = vsub.f32 1.5, %v1701
        %v1703 = vmul.f32 %v1698, %v1702
        %vm1704 = vweird.f32 %v1558
        %vm1705 = vweird.f32 %v1698
        %vm1706 = vmor %vm1704, %vm1705
        %v1707 = vsel %vm1706, %v1698, %v1703
        %v1708 = vrsqrt.pop %v1559
        %v1709 = vmul.f32 %v1708, %v1559
        %v1710 = vmul.f32 %v1709, %v1708
        %v1711 = vmul.f32 0.5, %v1710
        %v1712 = vsub.f32 1.5, %v1711
        %v1713 = vmul.f32 %v1708, %v1712
        %vm1714 = vweird.f32 %v1559
        %vm1715 = vweird.f32 %v1708
        %vm1716 = vmor %vm1714, %vm1715
        %v1717 = vsel %vm1716, %v1708, %v1713
        %v1718 = vrsqrt.pop %v1560
        %v1719 = vmul.f32 %v1718, %v1560
        %v1720 = vmul.f32 %v1719, %v1718
        %v1721 = vmul.f32 0.5, %v1720
        %v1722 = vsub.f32 1.5, %v1721
        %v1723 = vmul.f32 %v1718, %v1722
        %vm1724 = vweird.f32 %v1560
        %vm1725 = vweird.f32 %v1718
        %vm1726 = vmor %vm1724, %vm1725
        %v1727 = vsel %vm1726, %v1718, %v1723
        %v1728 = vrsqrt.pop %v1561
        %v1729 = vmul.f32 %v1728, %v1561
        %v1730 = vmul.f32 %v1729, %v1728
        %v1731 = vmul.f32 0.5, %v1730
        %v1732 = vsub.f32 1.5, %v1731
        %v1733 = vmul.f32 %v1728, %v1732
        %vm1734 = vweird.f32 %v1561
        %vm1735 = vweird.f32 %v1728
        %vm1736 = vmor %vm1734, %vm1735
        %v1737 = vsel %vm1736, %v1728, %v1733
        %v1738 = vrsqrt.pop %v1562
        %v1739 = vmul.f32 %v1738, %v1562
        %v1740 = vmul.f32 %v1739, %v1738
        %v1741 = vmul.f32 0.5, %v1740
        %v1742 = vsub.f32 1.5, %v1741
        %v1743 = vmul.f32 %v1738, %v1742
        %vm1744 = vweird.f32 %v1562
        %vm1745 = vweird.f32 %v1738
        %vm1746 = vmor %vm1744, %vm1745
        %v1747 = vsel %vm1746, %v1738, %v1743
        %v1748 = vrsqrt.pop %v1563
        %v1749 = vmul.f32 %v1748, %v1563
        %v1750 = vmul.f32 %v1749, %v1748
        %v1751 = vmul.f32 0.5, %v1750
        %v1752 = vsub.f32 1.5, %v1751
        %v1753 = vmul.f32 %v1748, %v1752
        %vm1754 = vweird.f32 %v1563
        %vm1755 = vweird.f32 %v1748
        %vm1756 = vmor %vm1754, %vm1755
        %v1757 = vsel %vm1756, %v1748, %v1753
        %v1758 = vrsqrt.pop %v1564
        %v1759 = vmul.f32 %v1758, %v1564
        %v1760 = vmul.f32 %v1759, %v1758
        %v1761 = vmul.f32 0.5, %v1760
        %v1762 = vsub.f32 1.5, %v1761
        %v1763 = vmul.f32 %v1758, %v1762
        %vm1764 = vweird.f32 %v1564
        %vm1765 = vweird.f32 %v1758
        %vm1766 = vmor %vm1764, %vm1765
        %v1767 = vsel %vm1766, %v1758, %v1763
        %v1768 = vrsqrt.pop %v1565
        %v1769 = vmul.f32 %v1768, %v1565
        %v1770 = vmul.f32 %v1769, %v1768
        %v1771 = vmul.f32 0.5, %v1770
        %v1772 = vsub.f32 1.5, %v1771
        %v1773 = vmul.f32 %v1768, %v1772
        %vm1774 = vweird.f32 %v1565
        %vm1775 = vweird.f32 %v1768
        %vm1776 = vmor %vm1774, %vm1775
        %v1777 = vsel %vm1776, %v1768, %v1773
        %v1778 = vrsqrt.pop %v1566
        %v1779 = vmul.f32 %v1778, %v1566
        %v1780 = vmul.f32 %v1779, %v1778
        %v1781 = vmul.f32 0.5, %v1780
        %v1782 = vsub.f32 1.5, %v1781
        %v1783 = vmul.f32 %v1778, %v1782
        %vm1784 = vweird.f32 %v1566
        %vm1785 = vweird.f32 %v1778
        %vm1786 = vmor %vm1784, %vm1785
        %v1787 = vsel %vm1786, %v1778, %v1783
        %v1788 = vrsqrt.pop %v1567
        %v1789 = vmul.f32 %v1788, %v1567
        %v1790 = vmul.f32 %v1789, %v1788
        %v1791 = vmul.f32 0.5, %v1790
        %v1792 = vsub.f32 1.5, %v1791
        %v1793 = vmul.f32 %v1788, %v1792
        %vm1794 = vweird.f32 %v1567
        %vm1795 = vweird.f32 %v1788
        %vm1796 = vmor %vm1794, %vm1795
        %v1797 = vsel %vm1796, %v1788, %v1793
        %v1798 = vrsqrt.pop %v1568
        %v1799 = vmul.f32 %v1798, %v1568
        %v1800 = vmul.f32 %v1799, %v1798
        %v1801 = vmul.f32 0.5, %v1800
        %v1802 = vsub.f32 1.5, %v1801
        %v1803 = vmul.f32 %v1798, %v1802
        %vm1804 = vweird.f32 %v1568
        %vm1805 = vweird.f32 %v1798
        %vm1806 = vmor %vm1804, %vm1805
        %v1807 = vsel %vm1806, %v1798, %v1803
        %v1808 = vrsqrt.pop %v1569
        %v1809 = vmul.f32 %v1808, %v1569
        %v1810 = vmul.f32 %v1809, %v1808
        %v1811 = vmul.f32 0.5, %v1810
        %v1812 = vsub.f32 1.5, %v1811
        %v1813 = vmul.f32 %v1808, %v1812
        %vm1814 = vweird.f32 %v1569
        %vm1815 = vweird.f32 %v1808
        %vm1816 = vmor %vm1814, %vm1815
        %v1817 = vsel %vm1816, %v1808, %v1813
        %v1818 = vrsqrt.pop %v1570
        %v1819 = vmul.f32 %v1818, %v1570
        %v1820 = vmul.f32 %v1819, %v1818
        %v1821 = vmul.f32 0.5, %v1820
        %v1822 = vsub.f32 1.5, %v1821
        %v1823 = vmul.f32 %v1818, %v1822
        %vm1824 = vweird.f32 %v1570
        %vm1825 = vweird.f32 %v1818
        %vm1826 = vmor %vm1824, %vm1825
        %v1827 = vsel %vm1826, %v1818, %v1823
        %v1828 = vrsqrt.pop %v1571
        %v1829 = vmul.f32 %v1828, %v1571
        %v1830 = vmul.f32 %v1829, %v1828
        %v1831 = vmul.f32 0.5, %v1830
        %v1832 = vsub.f32 1.5, %v1831
        %v1833 = vmul.f32 %v1828, %v1832
        %vm1834 = vweird.f32 %v1571
        %vm1835 = vweird.f32 %v1828
        %vm1836 = vmor %vm1834, %vm1835
        %v1837 = vsel %vm1836, %v1828, %v1833
        %v1838 = vrsqrt.pop %v1572
        %v1839 = vmul.f32 %v1838, %v1572
        %v1840 = vmul.f32 %v1839, %v1838
        %v1841 = vmul.f32 0.5, %v1840
        %v1842 = vsub.f32 1.5, %v1841
        %v1843 = vmul.f32 %v1838, %v1842
        %vm1844 = vweird.f32 %v1572
        %vm1845 = vweird.f32 %v1838
        %vm1846 = vmor %vm1844, %vm1845
        %v1847 = vsel %vm1846, %v1838, %v1843
        %v1848 = vrsqrt.pop %v1573
        %v1849 = vmul.f32 %v1848, %v1573
        %v1850 = vmul.f32 %v1849, %v1848
        %v1851 = vmul.f32 0.5, %v1850
        %v1852 = vsub.f32 1.5, %v1851
        %v1853 = vmul.f32 %v1848, %v1852
        %vm1854 = vweird.f32 %v1573
        %vm1855 = vweird.f32 %v1848
        %vm1856 = vmor %vm1854, %vm1855
        %v1857 = vsel %vm1856, %v1848, %v1853
        %v1858 = vrsqrt.pop %v1574
        %v1859 = vmul.f32 %v1858, %v1574
        %v1860 = vmul.f32 %v1859, %v1858
        %v1861 = vmul.f32 0.5, %v1860
        %v1862 = vsub.f32 1.5, %v1861
        %v1863 = vmul.f32 %v1858, %v1862
        %vm1864 = vweird.f32 %v1574
        %vm1865 = vweird.f32 %v1858
        %vm1866 = vmor %vm1864, %vm1865
        %v1867 = vsel %vm1866, %v1858, %v1863
        %v1868 = vrsqrt.pop %v1575
        %v1869 = vmul.f32 %v1868, %v1575
        %v1870 = vmul.f32 %v1869, %v1868
        %v1871 = vmul.f32 0.5, %v1870
        %v1872 = vsub.f32 1.5, %v1871
        %v1873 = vmul.f32 %v1868, %v1872
        %vm1874 = vweird.f32 %v1575
        %vm1875 = vweird.f32 %v1868
        %vm1876 = vmor %vm1874, %vm1875
        %v1877 = vsel %vm1876, %v1868, %v1873
        %v1878 = vrsqrt.pop %v1576
        %v1879 = vmul.f32 %v1878, %v1576
        %v1880 = vmul.f32 %v1879, %v1878
        %v1881 = vmul.f32 0.5, %v1880
        %v1882 = vsub.f32 1.5, %v1881
        %v1883 = vmul.f32 %v1878, %v1882
        %vm1884 = vweird.f32 %v1576
        %vm1885 = vweird.f32 %v1878
        %vm1886 = vmor %vm1884, %vm1885
        %v1887 = vsel %vm1886, %v1878, %v1883
        %v1888 = vrsqrt.pop %v1577
        %v1889 = vmul.f32 %v1888, %v1577
        %v1890 = vmul.f32 %v1889, %v1888
        %v1891 = vmul.f32 0.5, %v1890
        %v1892 = vsub.f32 1.5, %v1891
        %v1893 = vmul.f32 %v1888, %v1892
        %vm1894 = vweird.f32 %v1577
        %vm1895 = vweird.f32 %v1888
        %vm1896 = vmor %vm1894, %vm1895
        %v1897 = vsel %vm1896, %v1888, %v1893
        %v1898 = vmul.f32 %v1514, %v1587
        %v1899 = vmul.f32 %v1515, %v1597
        %v1900 = vmul.f32 %v1516, %v1607
        %v1901 = vmul.f32 %v1517, %v1617
        %v1902 = vmul.f32 %v1518, %v1627
        %v1903 = vmul.f32 %v1519, %v1637
        %v1904 = vmul.f32 %v1520, %v1647
        %v1905 = vmul.f32 %v1521, %v1657
        %v1906 = vmul.f32 %v1522, %v1667
        %v1907 = vmul.f32 %v1523, %v1677
        %v1908 = vmul.f32 %v1524, %v1687
        %v1909 = vmul.f32 %v1525, %v1697
        %v1910 = vmul.f32 %v1526, %v1707
        %v1911 = vmul.f32 %v1527, %v1717
        %v1912 = vmul.f32 %v1528, %v1727
        %v1913 = vmul.f32 %v1529, %v1737
        %v1914 = vmul.f32 %v1530, %v1747
        %v1915 = vmul.f32 %v1531, %v1757
        %v1916 = vmul.f32 %v1532, %v1767
        %v1917 = vmul.f32 %v1533, %v1777
        %v1918 = vmul.f32 %v1534, %v1787
        %v1919 = vmul.f32 %v1535, %v1797
        %v1920 = vmul.f32 %v1536, %v1807
        %v1921 = vmul.f32 %v1537, %v1817
        %v1922 = vmul.f32 %v1538, %v1827
        %v1923 = vmul.f32 %v1539, %v1837
        %v1924 = vmul.f32 %v1540, %v1847
        %v1925 = vmul.f32 %v1541, %v1857
        %v1926 = vmul.f32 %v1542, %v1867
        %v1927 = vmul.f32 %v1543, %v1877
        %v1928 = vmul.f32 %v1544, %v1887
        %v1929 = vmul.f32 %v1545, %v1897
        %v1930 = vperm.slane %v278, 4
        %v1931 = vmul.f32 %v1898, %v1930
        %v1932 = vmul.f32 %v1899, %v1930
        %v1933 = vmul.f32 %v1900, %v1930
        %v1934 = vmul.f32 %v1901, %v1930
        %v1935 = vmul.f32 %v1902, %v1930
        %v1936 = vmul.f32 %v1903, %v1930
        %v1937 = vmul.f32 %v1904, %v1930
        %v1938 = vmul.f32 %v1905, %v1930
        %v1939 = vmul.f32 %v1906, %v1930
        %v1940 = vmul.f32 %v1907, %v1930
        %v1941 = vmul.f32 %v1908, %v1930
        %v1942 = vmul.f32 %v1909, %v1930
        %v1943 = vmul.f32 %v1910, %v1930
        %v1944 = vmul.f32 %v1911, %v1930
        %v1945 = vmul.f32 %v1912, %v1930
        %v1946 = vmul.f32 %v1913, %v1930
        %v1947 = vmul.f32 %v1914, %v1930
        %v1948 = vmul.f32 %v1915, %v1930
        %v1949 = vmul.f32 %v1916, %v1930
        %v1950 = vmul.f32 %v1917, %v1930
        %v1951 = vmul.f32 %v1918, %v1930
        %v1952 = vmul.f32 %v1919, %v1930
        %v1953 = vmul.f32 %v1920, %v1930
        %v1954 = vmul.f32 %v1921, %v1930
        %v1955 = vmul.f32 %v1922, %v1930
        %v1956 = vmul.f32 %v1923, %v1930
        %v1957 = vmul.f32 %v1924, %v1930
        %v1958 = vmul.f32 %v1925, %v1930
        %v1959 = vmul.f32 %v1926, %v1930
        %v1960 = vmul.f32 %v1927, %v1930
        %v1961 = vmul.f32 %v1928, %v1930
        %v1962 = vmul.f32 %v1929, %v1930
        %v1963 = vperm.slane %v278, 5
        %v1964 = vadd.f32 %v1931, %v1963
        %v1965 = vadd.f32 %v1932, %v1963
        %v1966 = vadd.f32 %v1933, %v1963
        %v1967 = vadd.f32 %v1934, %v1963
        %v1968 = vadd.f32 %v1935, %v1963
        %v1969 = vadd.f32 %v1936, %v1963
        %v1970 = vadd.f32 %v1937, %v1963
        %v1971 = vadd.f32 %v1938, %v1963
        %v1972 = vadd.f32 %v1939, %v1963
        %v1973 = vadd.f32 %v1940, %v1963
        %v1974 = vadd.f32 %v1941, %v1963
        %v1975 = vadd.f32 %v1942, %v1963
        %v1976 = vadd.f32 %v1943, %v1963
        %v1977 = vadd.f32 %v1944, %v1963
        %v1978 = vadd.f32 %v1945, %v1963
        %v1979 = vadd.f32 %v1946, %v1963
        %v1980 = vadd.f32 %v1947, %v1963
        %v1981 = vadd.f32 %v1948, %v1963
        %v1982 = vadd.f32 %v1949, %v1963
        %v1983 = vadd.f32 %v1950, %v1963
        %v1984 = vadd.f32 %v1951, %v1963
        %v1985 = vadd.f32 %v1952, %v1963
        %v1986 = vadd.f32 %v1953, %v1963
        %v1987 = vadd.f32 %v1954, %v1963
        %v1988 = vadd.f32 %v1955, %v1963
        %v1989 = vadd.f32 %v1956, %v1963
        %v1990 = vadd.f32 %v1957, %v1963
        %v1991 = vadd.f32 %v1958, %v1963
        %v1992 = vadd.f32 %v1959, %v1963
        %v1993 = vadd.f32 %v1960, %v1963
        %v1994 = vadd.f32 %v1961, %v1963
        %v1995 = vadd.f32 %v1962, %v1963
        %1996 = vst [vmem:[%s257] sm:$0xff] %v1964
        %1997 = vst [vmem:[%s257 + $0x8] sm:$0xff] %v1965
        %1998 = vst [vmem:[%s257 + $0x10] sm:$0xff] %v1966
        %1999 = vst [vmem:[%s257 + $0x18] sm:$0xff] %v1967
        %2000 = vst [vmem:[%s257 + $0x20] sm:$0xff] %v1968
        %2001 = vst [vmem:[%s257 + $0x28] sm:$0xff] %v1969
        %2002 = vst [vmem:[%s257 + $0x30] sm:$0xff] %v1970
        %2003 = vst [vmem:[%s257 + $0x38] sm:$0xff] %v1971
        %2004 = vst [vmem:[%s257 + $0x40] sm:$0xff] %v1972
        %2005 = vst [vmem:[%s257 + $0x48] sm:$0xff] %v1973
        %2006 = vst [vmem:[%s257 + $0x50] sm:$0xff] %v1974
        %2007 = vst [vmem:[%s257 + $0x58] sm:$0xff] %v1975
        %2008 = vst [vmem:[%s257 + $0x60] sm:$0xff] %v1976
        %2009 = vst [vmem:[%s257 + $0x68] sm:$0xff] %v1977
        %2010 = vst [vmem:[%s257 + $0x70] sm:$0xff] %v1978
        %2011 = vst [vmem:[%s257 + $0x78] sm:$0xff] %v1979
        %2012 = vst [vmem:[%s257 + $0x80] sm:$0xff] %v1980
        %2013 = vst [vmem:[%s257 + $0x88] sm:$0xff] %v1981
        %2014 = vst [vmem:[%s257 + $0x90] sm:$0xff] %v1982
        %2015 = vst [vmem:[%s257 + $0x98] sm:$0xff] %v1983
        %2016 = vst [vmem:[%s257 + $0xa0] sm:$0xff] %v1984
        %2017 = vst [vmem:[%s257 + $0xa8] sm:$0xff] %v1985
        %2018 = vst [vmem:[%s257 + $0xb0] sm:$0xff] %v1986
        %2019 = vst [vmem:[%s257 + $0xb8] sm:$0xff] %v1987
        %2020 = vst [vmem:[%s257 + $0xc0] sm:$0xff] %v1988
        %2021 = vst [vmem:[%s257 + $0xc8] sm:$0xff] %v1989
        %2022 = vst [vmem:[%s257 + $0xd0] sm:$0xff] %v1990
        %2023 = vst [vmem:[%s257 + $0xd8] sm:$0xff] %v1991
        %2024 = vst [vmem:[%s257 + $0xe0] sm:$0xff] %v1992
        %2025 = vst [vmem:[%s257 + $0xe8] sm:$0xff] %v1993
        %2026 = vst [vmem:[%s257 + $0xf0] sm:$0xff] %v1994
        %2027 = vst [vmem:[%s257 + $0xf8] sm:$0xff] %v1995
        %s2028 = sand.u32 %s159, 1
        %s2029 = scalar_lea.sflag [#allocation3], %s2028
        %s2030 = sand.u32 %s159, 1
        %s2031 = smul.addr %s2030, 256
        %s2032 = scalar_lea.vmem [#allocation2], %s2031
        // Predicated region
        $region45: #{tpu_custom_call.1} parent=43 // pred_check
          %p2033 = pneg %p169
        $region46: #{tpu_custom_call.1} parent=43 // pred_check_branch
          %2035 = sbr.rel (%p2033) target = $region48
        $region47: #{tpu_custom_call.1} parent=43 // pred_region
          %s2036 = smul.u32 32, %s20
          %s2037 = ssub.s32 38, %s2036
          %p2038 = scmp.lt.s32.totalorder %s2037, 32
          %s2039 = scalar_select %p2038, %s2037, 32
          %s2040 = smul.u32 8, %s2039
          %s2041 = ssub.s32 256, %s2040
          %s2042 = sshll.u32 %s2041, 4
          %2043 = vsyncadd %s2029, %s2042
          %p2044 = scmp.ne.s32.totalorder 0, %s2040
          %s2045 = smul.addr %s2036, 8
          %s2046 = scalar_lea.hbm %s6, %s2045
          %s2047 = smul.u32 8, %s2039
          %s2048 = sshll.u32 %s2032, 4
          %s2049 = int_to_ptr.vmem [resolvable:$true] %s2048
          %s2050 = sshll.u32 %s2046, 4
          %s2051 = int_to_ptr.hbm [resolvable:$true] %s2050
          %s2052 = sshll.u32 %s2047, 4
          %2056 = dma.vmem_to_hbm [thread:$0]  (%p2044), %s2049, %s2052, %s2051, %s2029, 128, 128, 8
        $region48: #{tpu_custom_call.1} parent=43 // pred_fallthru
          _
      $region44: #{tpu_custom_call.1} parent=5 // pred_fallthru
        _
      %p2057 = scmp.le.s32.totalorder 2, %s15
      // Predicated region
      $region49: #{tpu_custom_call.1} parent=5 // pred_check
        %p2058 = pneg %p2057
      $region50: #{tpu_custom_call.1} parent=5 // pred_check_branch
        %2060 = sbr.rel (%p2058) target = $region52
      $region51: #{tpu_custom_call.1} parent=5 // pred_region
        %s2061 = ssub.s32 %s15, 2
        // Predicated region
        $region53: #{tpu_custom_call.1} parent=51 // pred_check
          %p2062 = pneg %p175
        $region54: #{tpu_custom_call.1} parent=51 // pred_check_branch
          %2064 = sbr.rel (%p2062) target = $region56
        $region55: #{tpu_custom_call.1} parent=51 // pred_region
          %s2065 = sand.u32 %s160, 1
          %s2066 = scalar_lea.sflag [#allocation3], %s2065
          %s2067 = sand.u32 %s160, 1
          %s2068 = smul.addr %s2067, 256
          %s2069 = scalar_lea.vmem [#allocation2], %s2068
          %2071 = dma.done %s2066, 4096
        $region56: #{tpu_custom_call.1} parent=51 // pred_fallthru
          _
      $region52: #{tpu_custom_call.1} parent=5 // pred_fallthru
        _
    $region6: #{tpu_custom_call.1} parent=1 // loop_footer
      %s19 = sadd.s32 1, %s15
    $region7: #{tpu_custom_call.1} parent=1 // loop_footer_branch
      %14 = sbr.rel target = $region3
    $region8: #{tpu_custom_call.1} parent=1 // loop_exit
      _
    %2072 = vsyncpa [#allocation3], 1
    %s2073 = scalar_lea.sflag [#allocation3], 1
    %2074 = vsyncpa %s2073, 1

</llo_original>
